<compile_context>
chip_gen: v5e
topology: v5e:2x2
jax: 0.10.0
libtpu: 0.0.40
codegen_flags: <defaults>
</compile_context>

<pallas_src>
import jax
import jax.numpy as jnp
from jax import lax
from jax.experimental import pallas as pl
from jax.experimental.pallas import tpu as pltpu

K = 5            # knn_graph k (loop=True -> self counted among the k nearest)
POS_SCALE = 5.0  # synmol: pos = pos * 5.0 (pos_coef is None)
BIG = 1e30


# ---------------------------------------------------------------------------
# Fused kernel: pos-scale + knn + edge attrs + message passing + pool + mlp_out
# for a block of G graphs, flattened to GN = G*N rows.
# ---------------------------------------------------------------------------
def _fused_kernel(pos_ref, x_ref,
                  w_in_ref, w_hpack_ref, w_de_ref, wh_agg_ref,
                  w1_ref, w2_ref, w3_ref,
                  bpack_ref, b1_ref, b3_ref,
                  out_ref):
    f32 = jnp.float32
    cdt = w_in_ref.dtype                                   # MXU feed dtype (f32 or bf16)

    pos3 = pos_ref[...].astype(f32) * POS_SCALE            # [G, N, 3] calc_geo_feat scaling
    x3 = x_ref[...].astype(f32)                            # [G, N, F]
    G, N, _ = pos3.shape
    H = w_in_ref.shape[1]
    GN = G * N

    pos = pos3.reshape(GN, 3)
    x = x3.reshape(GN, x3.shape[-1])

    bp = bpack_ref[...]                                    # [4, H] = [b_in; b_e; b_h; b2]
    b_in, b_e, b_h, b2 = bp[0:1, :], bp[1:2, :], bp[2:3, :], bp[3:4, :]

    # ---- node embedding + packed shared-LHS projections ---------------------
    h = jnp.dot(x.astype(cdt), w_in_ref[...], preferred_element_type=f32) + b_in   # [GN, H]
    hW = jnp.dot(h.astype(cdt), w_hpack_ref[...], preferred_element_type=f32)      # [GN, 3H]
    base_e = hW[:, 0:H] + b_e          # h_i @ We_hi + b_e   (edge message, centre node)
    hWj = hW[:, H:2 * H]               # h_j @ We_hj         (gathered per neighbour)
    h_self = hW[:, 2 * H:3 * H]        # h_i @ Wh_self       (node update)

    # gather source: one matmul per k fetches neighbour embedding AND position
    src = jnp.concatenate([hWj, pos], axis=1)                                       # [GN, H+3]

    # ---- flattened per-block pairwise kNN scores -----------------------------
    # score[i, j] = ||p_j||^2 - 2<p_i, p_j> ; the row-constant ||p_i||^2 term cannot
    # change the per-row ordering.  Cross-graph pairs are masked to +BIG.
    p2 = jnp.sum(pos * pos, axis=1, keepdims=True)                                  # [GN, 1]
    a_feat = jnp.concatenate([jnp.ones((GN, 1), f32), -2.0 * pos], axis=1)          # [GN, 4]
    b_feat = jnp.concatenate([p2, pos], axis=1)                                     # [GN, 4]
    score = jnp.einsum('ic,jc->ij', a_feat, b_feat, preferred_element_type=f32)     # [GN, GN]

    col = lax.broadcasted_iota(jnp.int32, (1, GN), 1).astype(f32)                   # [1, GN]
    row = lax.broadcasted_iota(jnp.int32, (GN, 1), 0).astype(f32)                   # [GN, 1]
    inv_n = 1.0 / N
    same_graph = (jnp.floor((row + 0.5) * inv_n) ==
                  jnp.floor((col + 0.5) * inv_n))                                   # [GN, GN]
    remaining = jnp.where(same_graph, score, BIG)

    # edge-attr weight rows (hoisted; applied as VPU broadcast FMAs, no 4-deep matmul)
    wde = w_de_ref[...]                                                             # [4, H]
    wd_d, wd_x, wd_y, wd_z = wde[0:1, :], wde[1:2, :], wde[2:3, :], wde[3:4, :]

    agg = jnp.zeros((GN, H), f32)
    # K=5 nearest neighbours (loop=True: self edge always selected; ties -> lowest index,
    # matching the previous top_k-equivalent behaviour).
    for _ in range(K):
        mval = jnp.min(remaining, axis=1, keepdims=True)                            # [GN, 1]
        cand = jnp.where(remaining <= mval, col, jnp.float32(GN))
        sel = jnp.min(cand, axis=1, keepdims=True)                                  # [GN, 1]
        is_sel = col == sel                                                         # [GN, GN]
        one_hot = is_sel.astype(f32)

        # block-diagonal gather of [neighbour embedding | neighbour position]
        gathered = jnp.dot(one_hot, src, preferred_element_type=f32)                # [GN, H+3]
        hj = gathered[:, 0:H]
        pos_j = gathered[:, H:H + 3]

        # calc_edge_attr (edge j -> i): dist = sqrt(d2), dir = rel/dist, fused in one rsqrt:
        #   dist*Wd + dir@Wdir == inv * (d2*Wd + rel_x*Wx + rel_y*Wy + rel_z*Wz)
        rel = pos_j - pos                                                           # [GN, 3]
        d2 = jnp.sum(rel * rel, axis=1, keepdims=True)                              # [GN, 1]
        inv = lax.rsqrt(d2 + 1e-12)
        de_lin = (d2 * wd_d + rel[:, 0:1] * wd_x
                  + rel[:, 1:2] * wd_y + rel[:, 2:3] * wd_z)                        # [GN, H]

        # EGNN-style edge message: silu(h_i@We_hi + h_j@We_hj + [dist,dir]@We_de + b_e)
        msg = jax.nn.silu(base_e + hj + inv * de_lin)                               # [GN, H]
        agg = agg + msg

        remaining = jnp.where(is_sel, BIG, remaining)

    agg = agg * (1.0 / K)          # mean over the K in-edges of every node (needs N >= K)

    # ---- node update: silu(h@Wh_self + agg@Wh_agg + b_h) ---------------------
    emb = jax.nn.silu(h_self + b_h
                      + jnp.dot(agg.astype(cdt), wh_agg_ref[...],
                                preferred_element_type=f32))                        # [GN, H]

    # ---- global_mean_pool over the N nodes of each graph ---------------------
    pooled = jnp.sum(emb.reshape(G, N, H), axis=1) * (1.0 / N)                      # [G, H]

    # ---- mlp_out: [H, 2H, H, out_dim] (eval: dropout identity) ---------------
    z = jax.nn.relu(jnp.dot(pooled.astype(cdt), w1_ref[...],
                            preferred_element_type=f32) + b1_ref[...])
    z = jax.nn.relu(jnp.dot(z.astype(cdt), w2_ref[...],
                            preferred_element_type=f32) + b2)
    o = jnp.dot(z.astype(cdt), w3_ref[...], preferred_element_type=f32) + b3_ref[...]

    out_ref[...] = o[None]                                                          # [1, G, out_dim]


# ---------------------------------------------------------------------------
# Wrapper
# ---------------------------------------------------------------------------
def _pick_graphs_per_block(batch, n_nodes, target_rows=512, min_split_rows=256):
    """Graphs per block.  Target GN ~= 512 keeps the [GN,GN] pairwise buffers at
    ~1 MiB each (fine for v7x's smaller VMEM) while filling the MXU M dimension."""
    target_g = max(1, target_rows // max(1, n_nodes))
    if batch <= target_g:
        # Small batch: keep one big block unless splitting in two still leaves both
        # blocks reasonably full (so v7x's two TensorCores both get a grid step).
        if batch * n_nodes >= 2 * min_split_rows:
            return -(-batch // 2)
        return batch
    return target_g


def model_forward(x, pos, params, graphs_per_block=None, mxu_dtype=jnp.float32):
    B, N, F = x.shape
    out_dim = params["W3"].shape[1]
    assert N >= K, "knn_graph(k=5, loop=True) needs at least K nodes per graph"

    G = graphs_per_block if graphs_per_block is not None else _pick_graphs_per_block(B, N)
    assert G * N <= 1024, "per-block pairwise matrix too large for VMEM; lower graphs_per_block"
    # TODO(synk): graphs with G*N > 1024 need a neighbour-tiled variant of this kernel.

    num_blocks = -(-B // G)
    Bp = num_blocks * G
    if Bp != B:  # pad with empty graphs instead of shrinking G (padded rows sliced off below)
        x = jnp.concatenate([x, jnp.zeros((Bp - B, N, F), x.dtype)], axis=0)
        pos = jnp.concatenate([pos, jnp.zeros((Bp - B, N, 3), pos.dtype)], axis=0)

    # Projection weights optionally fed to the MXU in bf16 (f32 accumulation; review item
    # for v6e/v7x).  Edge-attr rows / biases / distance math stay f32.
    mm = lambda w: w.astype(mxu_dtype)
    w_args = [mm(params["W_in"]), mm(params["W_hpack"]), params["W_de"],
              mm(params["Wh_agg"]), mm(params["W1"]), mm(params["W2"]), mm(params["W3"]),
              params["b_pack"], params["b1"], params["b3"]]

    def wspec(shape):
        nd = len(shape)
        return pl.BlockSpec(shape, lambda b, _nd=nd: (0,) * _nd)

    out = pl.pallas_call(
        _fused_kernel,
        out_shape=jax.ShapeDtypeStruct((num_blocks, G, out_dim), jnp.float32),
        grid=(num_blocks,),
        in_specs=[pl.BlockSpec((G, N, 3), lambda b: (b, 0, 0)),
                  pl.BlockSpec((G, N, F), lambda b: (b, 0, 0))]
                 + [wspec(w.shape) for w in w_args],
        out_specs=pl.BlockSpec((1, G, out_dim), lambda b: (b, 0, 0)),
        compiler_params=pltpu.CompilerParams(dimension_semantics=("parallel",)),
    )(pos, x, *w_args)

    return out.reshape(Bp, out_dim)[:B]                                             # logits [B, 1]


def init_params(key, F, H, out_dim=1):
    ks = jax.random.split(key, 10)

    def w(k, shape, scale=0.1):
        return (scale * jax.random.normal(k, shape)).astype(jnp.float32)

    z = lambda shape: jnp.zeros(shape, jnp.float32)
    # Packed shared-LHS projection: [We_hi | We_hj | Wh_self] -> [H, 3H]
    W_hpack = jnp.concatenate([w(ks[1], (H, H)), w(ks[2], (H, H)), w(ks[5], (H, H))], axis=1)
    # Edge-attr rows [W_dist; W_dir_x; W_dir_y; W_dir_z] -> [4, H] (applied as VPU FMAs)
    W_de = jnp.concatenate([w(ks[3], (1, H)), w(ks[4], (3, H))], axis=0)
    return {
        "W_in": w(ks[0], (F, H)),
        "W_hpack": W_hpack,
        "W_de": W_de,
        "Wh_agg": w(ks[6], (H, H)),
        "W1": w(ks[7], (H, 2 * H)),
        "W2": w(ks[8], (2 * H, H)),
        "W3": w(ks[9], (H, out_dim)),
        "b_pack": z((4, H)),          # rows: [b_in; b_e; b_h; b2]
        "b1": z((1, 2 * H)),
        "b3": z((1, out_dim)),
    }


if __name__ == "__main__":
    B, N, F, H = 2, 16, 4, 32
    key = jax.random.PRNGKey(0)
    kx, kp, kw = jax.random.split(key, 3)

    x = jax.random.normal(kx, (B, N, F), dtype=jnp.float32)
    pos = jax.random.normal(kp, (B, N, 3), dtype=jnp.float32)
    params = init_params(kw, F, H, out_dim=1)

    out = jax.jit(model_forward)(x, pos, params)
    jax.block_until_ready(out)
    assert out.shape == (B, 1) and out.dtype == jnp.float32
    assert bool(jnp.all(jnp.isfinite(out)))
    print("KERNEL_OK")
</pallas_src>

<mosaic_0001>
module attributes {stable_mosaic.version = 11 : i64} {
  func.func @_fused_kernel(%arg0: i32, %arg1: memref<2x16x3xf32, #tpu.memory_space<vmem>>, %arg2: memref<2x16x4xf32, #tpu.memory_space<vmem>>, %arg3: memref<4x32xf32, #tpu.memory_space<vmem>>, %arg4: memref<32x96xf32, #tpu.memory_space<vmem>>, %arg5: memref<4x32xf32, #tpu.memory_space<vmem>>, %arg6: memref<32x32xf32, #tpu.memory_space<vmem>>, %arg7: memref<32x64xf32, #tpu.memory_space<vmem>>, %arg8: memref<64x32xf32, #tpu.memory_space<vmem>>, %arg9: memref<32x1xf32, #tpu.memory_space<vmem>>, %arg10: memref<4x32xf32, #tpu.memory_space<vmem>>, %arg11: memref<1x64xf32, #tpu.memory_space<vmem>>, %arg12: memref<1x1xf32, #tpu.memory_space<vmem>>, %arg13: memref<1x2x1xf32, #tpu.memory_space<vmem>>) attributes {dimension_semantics = [#tpu.dimension_semantics<parallel>], iteration_bounds = array<i64: 1>, scalar_prefetch = 0 : i64, scratch_operands = 0 : i64, tpu.core_type = #tpu.core_type<tc>, window_params = [{transform_indices = @transform_0, window_bounds = array<i64: 2, 16, 3>}, {transform_indices = @transform_1, window_bounds = array<i64: 2, 16, 4>}, {pipeline_mode = #tpu.pipeline_mode<synchronous>, transform_indices = @transform_2, window_bounds = array<i64: 4, 32>}, {pipeline_mode = #tpu.pipeline_mode<synchronous>, transform_indices = @transform_3, window_bounds = array<i64: 32, 96>}, {pipeline_mode = #tpu.pipeline_mode<synchronous>, transform_indices = @transform_4, window_bounds = array<i64: 4, 32>}, {pipeline_mode = #tpu.pipeline_mode<synchronous>, transform_indices = @transform_5, window_bounds = array<i64: 32, 32>}, {pipeline_mode = #tpu.pipeline_mode<synchronous>, transform_indices = @transform_6, window_bounds = array<i64: 32, 64>}, {pipeline_mode = #tpu.pipeline_mode<synchronous>, transform_indices = @transform_7, window_bounds = array<i64: 64, 32>}, {pipeline_mode = #tpu.pipeline_mode<synchronous>, transform_indices = @transform_8, window_bounds = array<i64: 32, 1>}, {pipeline_mode = #tpu.pipeline_mode<synchronous>, transform_indices = @transform_9, window_bounds = array<i64: 4, 32>}, {pipeline_mode = #tpu.pipeline_mode<synchronous>, transform_indices = @transform_10, window_bounds = array<i64: 1, 64>}, {pipeline_mode = #tpu.pipeline_mode<synchronous>, transform_indices = @transform_11, window_bounds = array<i64: 1, 1>}, {transform_indices = @transform_12, window_bounds = array<i64: 1, 2, 1>}]} {
    %c0 = arith.constant 0 : index
    %c0_0 = arith.constant 0 : index
    %c0_1 = arith.constant 0 : index
    %0 = vector.load %arg1[%c0, %c0_0, %c0_1] : memref<2x16x3xf32, #tpu.memory_space<vmem>>, vector<2x16x3xf32>
    %cst = arith.constant 5.000000e+00 : f32
    %1 = vector.broadcast %cst : f32 to vector<2x16x3xf32>
    %2 = arith.mulf %0, %1 : vector<2x16x3xf32>
    %c0_2 = arith.constant 0 : index
    %c0_3 = arith.constant 0 : index
    %c0_4 = arith.constant 0 : index
    %3 = vector.load %arg2[%c0_2, %c0_3, %c0_4] : memref<2x16x4xf32, #tpu.memory_space<vmem>>, vector<2x16x4xf32>
    %4 = vector.shape_cast %2 : vector<2x16x3xf32> to vector<32x3xf32>
    %5 = vector.shape_cast %3 : vector<2x16x4xf32> to vector<32x4xf32>
    %c0_5 = arith.constant 0 : index
    %c0_6 = arith.constant 0 : index
    %6 = vector.load %arg10[%c0_5, %c0_6] : memref<4x32xf32, #tpu.memory_space<vmem>>, vector<4x32xf32>
    %7 = vector.extract_strided_slice %6 {offsets = [0, 0], sizes = [1, 32], strides = [1, 1]} : vector<4x32xf32> to vector<1x32xf32>
    %8 = vector.extract_strided_slice %6 {offsets = [1, 0], sizes = [1, 32], strides = [1, 1]} : vector<4x32xf32> to vector<1x32xf32>
    %9 = vector.extract_strided_slice %6 {offsets = [2, 0], sizes = [1, 32], strides = [1, 1]} : vector<4x32xf32> to vector<1x32xf32>
    %10 = vector.extract_strided_slice %6 {offsets = [3, 0], sizes = [1, 32], strides = [1, 1]} : vector<4x32xf32> to vector<1x32xf32>
    %c0_7 = arith.constant 0 : index
    %c0_8 = arith.constant 0 : index
    %11 = vector.load %arg3[%c0_7, %c0_8] : memref<4x32xf32, #tpu.memory_space<vmem>>, vector<4x32xf32>
    %cst_9 = arith.constant dense<0.000000e+00> : vector<32x32xf32>
    %12 = tpu.matmul %5, %11, %cst_9 {dimension_numbers = #tpu.dot_dimension_numbers<[1], [0], [0], [1], [0, 0, 1, 1], [], []>} : vector<32x4xf32>, vector<4x32xf32>, vector<32x32xf32> -> vector<32x32xf32>
    %13 = vector.broadcast %7 : vector<1x32xf32> to vector<32x32xf32>
    %14 = arith.addf %12, %13 : vector<32x32xf32>
    %c0_10 = arith.constant 0 : index
    %c0_11 = arith.constant 0 : index
    %15 = vector.load %arg4[%c0_10, %c0_11] : memref<32x96xf32, #tpu.memory_space<vmem>>, vector<32x96xf32>
    %cst_12 = arith.constant dense<0.000000e+00> : vector<32x96xf32>
    %16 = tpu.matmul %14, %15, %cst_12 {dimension_numbers = #tpu.dot_dimension_numbers<[1], [0], [0], [1], [0, 0, 1, 1], [], []>} : vector<32x32xf32>, vector<32x96xf32>, vector<32x96xf32> -> vector<32x96xf32>
    %17 = vector.extract_strided_slice %16 {offsets = [0, 0], sizes = [32, 32], strides = [1, 1]} : vector<32x96xf32> to vector<32x32xf32>
    %18 = vector.broadcast %8 : vector<1x32xf32> to vector<32x32xf32>
    %19 = arith.addf %17, %18 : vector<32x32xf32>
    %20 = vector.extract_strided_slice %16 {offsets = [0, 32], sizes = [32, 32], strides = [1, 1]} : vector<32x96xf32> to vector<32x32xf32>
    %21 = vector.extract_strided_slice %16 {offsets = [0, 64], sizes = [32, 32], strides = [1, 1]} : vector<32x96xf32> to vector<32x32xf32>
    %22 = tpu.concatenate %20, %4 in 1 : vector<32x32xf32>, vector<32x3xf32> -> vector<32x35xf32>
    %23 = arith.mulf %4, %4 : vector<32x3xf32>
    %cst_13 = arith.constant dense<0.000000e+00> : vector<32xf32>
    %24 = vector.multi_reduction <add>, %23, %cst_13 [1] : vector<32x3xf32> to vector<32xf32>
    %25 = vector.shape_cast %24 : vector<32xf32> to vector<32x1xf32>
    %cst_14 = arith.constant 1.000000e+00 : f32
    %26 = vector.broadcast %cst_14 : f32 to vector<32x1xf32>
    %cst_15 = arith.constant -2.000000e+00 : f32
    %27 = vector.broadcast %cst_15 : f32 to vector<32x3xf32>
    %28 = arith.mulf %27, %4 : vector<32x3xf32>
    %29 = tpu.concatenate %26, %28 in 1 : vector<32x1xf32>, vector<32x3xf32> -> vector<32x4xf32>
    %30 = tpu.concatenate %25, %4 in 1 : vector<32x1xf32>, vector<32x3xf32> -> vector<32x4xf32>
    "tpu.trace_start"() <{level = 10 : i32, message = "ic,jc->ij"}> : () -> ()
    %cst_16 = arith.constant dense<0.000000e+00> : vector<32x32xf32>
    %31 = tpu.matmul %29, %30, %cst_16 {dimension_numbers = #tpu.dot_dimension_numbers<[1], [1], [0], [0], [0, 0, 1, 0], [], []>} : vector<32x4xf32>, vector<32x4xf32>, vector<32x32xf32> -> vector<32x32xf32>
    "tpu.trace_stop"() : () -> ()
    %32 = tpu.iota {dimensions = array<i32: 1>} : vector<1x32xi32>
    %33 = arith.sitofp %32 : vector<1x32xi32> to vector<1x32xf32>
    %34 = tpu.iota {dimensions = array<i32: 0>} : vector<32x1xi32>
    %35 = arith.sitofp %34 : vector<32x1xi32> to vector<32x1xf32>
    %cst_17 = arith.constant 5.000000e-01 : f32
    %36 = vector.broadcast %cst_17 : f32 to vector<32x1xf32>
    %37 = arith.addf %35, %36 : vector<32x1xf32>
    %cst_18 = arith.constant 6.250000e-02 : f32
    %38 = vector.broadcast %cst_18 : f32 to vector<32x1xf32>
    %39 = arith.mulf %37, %38 : vector<32x1xf32>
    %40 = math.floor %39 : vector<32x1xf32>
    %cst_19 = arith.constant 5.000000e-01 : f32
    %41 = vector.broadcast %cst_19 : f32 to vector<1x32xf32>
    %42 = arith.addf %33, %41 : vector<1x32xf32>
    %cst_20 = arith.constant 6.250000e-02 : f32
    %43 = vector.broadcast %cst_20 : f32 to vector<1x32xf32>
    %44 = arith.mulf %42, %43 : vector<1x32xf32>
    %45 = math.floor %44 : vector<1x32xf32>
    %46 = vector.broadcast %40 : vector<32x1xf32> to vector<32x32xf32>
    %47 = vector.broadcast %45 : vector<1x32xf32> to vector<32x32xf32>
    %48 = arith.cmpf oeq, %46, %47 : vector<32x32xf32>
    %cst_21 = arith.constant 1.000000e+30 : f32
    %49 = vector.broadcast %cst_21 : f32 to vector<32x32xf32>
    %50 = arith.select %48, %31, %49 : vector<32x32xi1>, vector<32x32xf32>
    %c0_22 = arith.constant 0 : index
    %c0_23 = arith.constant 0 : index
    %51 = vector.load %arg5[%c0_22, %c0_23] : memref<4x32xf32, #tpu.memory_space<vmem>>, vector<4x32xf32>
    %52 = vector.extract_strided_slice %51 {offsets = [0, 0], sizes = [1, 32], strides = [1, 1]} : vector<4x32xf32> to vector<1x32xf32>
    %53 = vector.extract_strided_slice %51 {offsets = [1, 0], sizes = [1, 32], strides = [1, 1]} : vector<4x32xf32> to vector<1x32xf32>
    %54 = vector.extract_strided_slice %51 {offsets = [2, 0], sizes = [1, 32], strides = [1, 1]} : vector<4x32xf32> to vector<1x32xf32>
    %55 = vector.extract_strided_slice %51 {offsets = [3, 0], sizes = [1, 32], strides = [1, 1]} : vector<4x32xf32> to vector<1x32xf32>
    %cst_24 = arith.constant 0.000000e+00 : f32
    %56 = vector.broadcast %cst_24 : f32 to vector<32x32xf32>
    %cst_25 = arith.constant dense<0x7F800000> : vector<32xf32>
    %57 = vector.multi_reduction <minimumf>, %50, %cst_25 [1] : vector<32x32xf32> to vector<32xf32>
    %58 = vector.shape_cast %57 : vector<32xf32> to vector<32x1xf32>
    %59 = vector.broadcast %58 : vector<32x1xf32> to vector<32x32xf32>
    %60 = arith.cmpf ole, %50, %59 : vector<32x32xf32>
    %cst_26 = arith.constant 3.200000e+01 : f32
    %61 = vector.shape_cast %33 : vector<1x32xf32> to vector<1x32xf32>
    %62 = vector.broadcast %61 : vector<1x32xf32> to vector<32x32xf32>
    %63 = vector.broadcast %cst_26 : f32 to vector<32x32xf32>
    %64 = arith.select %60, %62, %63 : vector<32x32xi1>, vector<32x32xf32>
    %cst_27 = arith.constant dense<0x7F800000> : vector<32xf32>
    %65 = vector.multi_reduction <minimumf>, %64, %cst_27 [1] : vector<32x32xf32> to vector<32xf32>
    %66 = vector.shape_cast %65 : vector<32xf32> to vector<32x1xf32>
    %67 = vector.broadcast %33 : vector<1x32xf32> to vector<32x32xf32>
    %68 = vector.broadcast %66 : vector<32x1xf32> to vector<32x32xf32>
    %69 = arith.cmpf oeq, %67, %68 : vector<32x32xf32>
    %70 = arith.extui %69 : vector<32x32xi1> to vector<32x32xi32>
    %71 = arith.sitofp %70 : vector<32x32xi32> to vector<32x32xf32>
    %cst_28 = arith.constant dense<0.000000e+00> : vector<32x35xf32>
    %72 = tpu.matmul %71, %22, %cst_28 {dimension_numbers = #tpu.dot_dimension_numbers<[1], [0], [0], [1], [0, 0, 1, 1], [], []>} : vector<32x32xf32>, vector<32x35xf32>, vector<32x35xf32> -> vector<32x35xf32>
    %73 = vector.extract_strided_slice %72 {offsets = [0, 0], sizes = [32, 32], strides = [1, 1]} : vector<32x35xf32> to vector<32x32xf32>
    %74 = vector.extract_strided_slice %72 {offsets = [0, 32], sizes = [32, 3], strides = [1, 1]} : vector<32x35xf32> to vector<32x3xf32>
    %75 = arith.subf %74, %4 : vector<32x3xf32>
    %76 = arith.mulf %75, %75 : vector<32x3xf32>
    %cst_29 = arith.constant dense<0.000000e+00> : vector<32xf32>
    %77 = vector.multi_reduction <add>, %76, %cst_29 [1] : vector<32x3xf32> to vector<32xf32>
    %78 = vector.shape_cast %77 : vector<32xf32> to vector<32x1xf32>
    %cst_30 = arith.constant 9.99999996E-13 : f32
    %79 = vector.broadcast %cst_30 : f32 to vector<32x1xf32>
    %80 = arith.addf %78, %79 : vector<32x1xf32>
    %81 = math.rsqrt %80 : vector<32x1xf32>
    %82 = vector.broadcast %78 : vector<32x1xf32> to vector<32x32xf32>
    %83 = vector.broadcast %52 : vector<1x32xf32> to vector<32x32xf32>
    %84 = arith.mulf %82, %83 : vector<32x32xf32>
    %85 = vector.extract_strided_slice %75 {offsets = [0, 0], sizes = [32, 1], strides = [1, 1]} : vector<32x3xf32> to vector<32x1xf32>
    %86 = vector.broadcast %85 : vector<32x1xf32> to vector<32x32xf32>
    %87 = vector.broadcast %53 : vector<1x32xf32> to vector<32x32xf32>
    %88 = arith.mulf %86, %87 : vector<32x32xf32>
    %89 = arith.addf %84, %88 : vector<32x32xf32>
    %90 = vector.extract_strided_slice %75 {offsets = [0, 1], sizes = [32, 1], strides = [1, 1]} : vector<32x3xf32> to vector<32x1xf32>
    %91 = vector.broadcast %90 : vector<32x1xf32> to vector<32x32xf32>
    %92 = vector.broadcast %54 : vector<1x32xf32> to vector<32x32xf32>
    %93 = arith.mulf %91, %92 : vector<32x32xf32>
    %94 = arith.addf %89, %93 : vector<32x32xf32>
    %95 = vector.extract_strided_slice %75 {offsets = [0, 2], sizes = [32, 1], strides = [1, 1]} : vector<32x3xf32> to vector<32x1xf32>
    %96 = vector.broadcast %95 : vector<32x1xf32> to vector<32x32xf32>
    %97 = vector.broadcast %55 : vector<1x32xf32> to vector<32x32xf32>
    %98 = arith.mulf %96, %97 : vector<32x32xf32>
    %99 = arith.addf %94, %98 : vector<32x32xf32>
    %100 = arith.addf %19, %73 : vector<32x32xf32>
    %101 = vector.broadcast %81 : vector<32x1xf32> to vector<32x32xf32>
    %102 = arith.mulf %101, %99 : vector<32x32xf32>
    %103 = arith.addf %100, %102 : vector<32x32xf32>
    %104 = arith.negf %103 : vector<32x32xf32>
    %105 = math.exp %104 : vector<32x32xf32>
    %cst_31 = arith.constant 1.000000e+00 : f32
    %106 = vector.broadcast %cst_31 : f32 to vector<32x32xf32>
    %107 = arith.addf %106, %105 : vector<32x32xf32>
    %108 = arith.divf %106, %107 : vector<32x32xf32>
    %109 = arith.mulf %103, %108 : vector<32x32xf32>
    %110 = arith.addf %56, %109 : vector<32x32xf32>
    %cst_32 = arith.constant 1.000000e+30 : f32
    %111 = vector.broadcast %cst_32 : f32 to vector<32x32xf32>
    %112 = arith.select %69, %111, %50 : vector<32x32xi1>, vector<32x32xf32>
    %cst_33 = arith.constant dense<0x7F800000> : vector<32xf32>
    %113 = vector.multi_reduction <minimumf>, %112, %cst_33 [1] : vector<32x32xf32> to vector<32xf32>
    %114 = vector.shape_cast %113 : vector<32xf32> to vector<32x1xf32>
    %115 = vector.broadcast %114 : vector<32x1xf32> to vector<32x32xf32>
    %116 = arith.cmpf ole, %112, %115 : vector<32x32xf32>
    %cst_34 = arith.constant 3.200000e+01 : f32
    %117 = vector.shape_cast %33 : vector<1x32xf32> to vector<1x32xf32>
    %118 = vector.broadcast %117 : vector<1x32xf32> to vector<32x32xf32>
    %119 = vector.broadcast %cst_34 : f32 to vector<32x32xf32>
    %120 = arith.select %116, %118, %119 : vector<32x32xi1>, vector<32x32xf32>
    %cst_35 = arith.constant dense<0x7F800000> : vector<32xf32>
    %121 = vector.multi_reduction <minimumf>, %120, %cst_35 [1] : vector<32x32xf32> to vector<32xf32>
    %122 = vector.shape_cast %121 : vector<32xf32> to vector<32x1xf32>
    %123 = vector.broadcast %33 : vector<1x32xf32> to vector<32x32xf32>
    %124 = vector.broadcast %122 : vector<32x1xf32> to vector<32x32xf32>
    %125 = arith.cmpf oeq, %123, %124 : vector<32x32xf32>
    %126 = arith.extui %125 : vector<32x32xi1> to vector<32x32xi32>
    %127 = arith.sitofp %126 : vector<32x32xi32> to vector<32x32xf32>
    %cst_36 = arith.constant dense<0.000000e+00> : vector<32x35xf32>
    %128 = tpu.matmul %127, %22, %cst_36 {dimension_numbers = #tpu.dot_dimension_numbers<[1], [0], [0], [1], [0, 0, 1, 1], [], []>} : vector<32x32xf32>, vector<32x35xf32>, vector<32x35xf32> -> vector<32x35xf32>
    %129 = vector.extract_strided_slice %128 {offsets = [0, 0], sizes = [32, 32], strides = [1, 1]} : vector<32x35xf32> to vector<32x32xf32>
    %130 = vector.extract_strided_slice %128 {offsets = [0, 32], sizes = [32, 3], strides = [1, 1]} : vector<32x35xf32> to vector<32x3xf32>
    %131 = arith.subf %130, %4 : vector<32x3xf32>
    %132 = arith.mulf %131, %131 : vector<32x3xf32>
    %cst_37 = arith.constant dense<0.000000e+00> : vector<32xf32>
    %133 = vector.multi_reduction <add>, %132, %cst_37 [1] : vector<32x3xf32> to vector<32xf32>
    %134 = vector.shape_cast %133 : vector<32xf32> to vector<32x1xf32>
    %cst_38 = arith.constant 9.99999996E-13 : f32
    %135 = vector.broadcast %cst_38 : f32 to vector<32x1xf32>
    %136 = arith.addf %134, %135 : vector<32x1xf32>
    %137 = math.rsqrt %136 : vector<32x1xf32>
    %138 = vector.broadcast %134 : vector<32x1xf32> to vector<32x32xf32>
    %139 = vector.broadcast %52 : vector<1x32xf32> to vector<32x32xf32>
    %140 = arith.mulf %138, %139 : vector<32x32xf32>
    %141 = vector.extract_strided_slice %131 {offsets = [0, 0], sizes = [32, 1], strides = [1, 1]} : vector<32x3xf32> to vector<32x1xf32>
    %142 = vector.broadcast %141 : vector<32x1xf32> to vector<32x32xf32>
    %143 = vector.broadcast %53 : vector<1x32xf32> to vector<32x32xf32>
    %144 = arith.mulf %142, %143 : vector<32x32xf32>
    %145 = arith.addf %140, %144 : vector<32x32xf32>
    %146 = vector.extract_strided_slice %131 {offsets = [0, 1], sizes = [32, 1], strides = [1, 1]} : vector<32x3xf32> to vector<32x1xf32>
    %147 = vector.broadcast %146 : vector<32x1xf32> to vector<32x32xf32>
    %148 = vector.broadcast %54 : vector<1x32xf32> to vector<32x32xf32>
    %149 = arith.mulf %147, %148 : vector<32x32xf32>
    %150 = arith.addf %145, %149 : vector<32x32xf32>
    %151 = vector.extract_strided_slice %131 {offsets = [0, 2], sizes = [32, 1], strides = [1, 1]} : vector<32x3xf32> to vector<32x1xf32>
    %152 = vector.broadcast %151 : vector<32x1xf32> to vector<32x32xf32>
    %153 = vector.broadcast %55 : vector<1x32xf32> to vector<32x32xf32>
    %154 = arith.mulf %152, %153 : vector<32x32xf32>
    %155 = arith.addf %150, %154 : vector<32x32xf32>
    %156 = arith.addf %19, %129 : vector<32x32xf32>
    %157 = vector.broadcast %137 : vector<32x1xf32> to vector<32x32xf32>
    %158 = arith.mulf %157, %155 : vector<32x32xf32>
    %159 = arith.addf %156, %158 : vector<32x32xf32>
    %160 = arith.negf %159 : vector<32x32xf32>
    %161 = math.exp %160 : vector<32x32xf32>
    %cst_39 = arith.constant 1.000000e+00 : f32
    %162 = vector.broadcast %cst_39 : f32 to vector<32x32xf32>
    %163 = arith.addf %162, %161 : vector<32x32xf32>
    %164 = arith.divf %162, %163 : vector<32x32xf32>
    %165 = arith.mulf %159, %164 : vector<32x32xf32>
    %166 = arith.addf %110, %165 : vector<32x32xf32>
    %cst_40 = arith.constant 1.000000e+30 : f32
    %167 = vector.broadcast %cst_40 : f32 to vector<32x32xf32>
    %168 = arith.select %125, %167, %112 : vector<32x32xi1>, vector<32x32xf32>
    %cst_41 = arith.constant dense<0x7F800000> : vector<32xf32>
    %169 = vector.multi_reduction <minimumf>, %168, %cst_41 [1] : vector<32x32xf32> to vector<32xf32>
    %170 = vector.shape_cast %169 : vector<32xf32> to vector<32x1xf32>
    %171 = vector.broadcast %170 : vector<32x1xf32> to vector<32x32xf32>
    %172 = arith.cmpf ole, %168, %171 : vector<32x32xf32>
    %cst_42 = arith.constant 3.200000e+01 : f32
    %173 = vector.shape_cast %33 : vector<1x32xf32> to vector<1x32xf32>
    %174 = vector.broadcast %173 : vector<1x32xf32> to vector<32x32xf32>
    %175 = vector.broadcast %cst_42 : f32 to vector<32x32xf32>
    %176 = arith.select %172, %174, %175 : vector<32x32xi1>, vector<32x32xf32>
    %cst_43 = arith.constant dense<0x7F800000> : vector<32xf32>
    %177 = vector.multi_reduction <minimumf>, %176, %cst_43 [1] : vector<32x32xf32> to vector<32xf32>
    %178 = vector.shape_cast %177 : vector<32xf32> to vector<32x1xf32>
    %179 = vector.broadcast %33 : vector<1x32xf32> to vector<32x32xf32>
    %180 = vector.broadcast %178 : vector<32x1xf32> to vector<32x32xf32>
    %181 = arith.cmpf oeq, %179, %180 : vector<32x32xf32>
    %182 = arith.extui %181 : vector<32x32xi1> to vector<32x32xi32>
    %183 = arith.sitofp %182 : vector<32x32xi32> to vector<32x32xf32>
    %cst_44 = arith.constant dense<0.000000e+00> : vector<32x35xf32>
    %184 = tpu.matmul %183, %22, %cst_44 {dimension_numbers = #tpu.dot_dimension_numbers<[1], [0], [0], [1], [0, 0, 1, 1], [], []>} : vector<32x32xf32>, vector<32x35xf32>, vector<32x35xf32> -> vector<32x35xf32>
    %185 = vector.extract_strided_slice %184 {offsets = [0, 0], sizes = [32, 32], strides = [1, 1]} : vector<32x35xf32> to vector<32x32xf32>
    %186 = vector.extract_strided_slice %184 {offsets = [0, 32], sizes = [32, 3], strides = [1, 1]} : vector<32x35xf32> to vector<32x3xf32>
    %187 = arith.subf %186, %4 : vector<32x3xf32>
    %188 = arith.mulf %187, %187 : vector<32x3xf32>
    %cst_45 = arith.constant dense<0.000000e+00> : vector<32xf32>
    %189 = vector.multi_reduction <add>, %188, %cst_45 [1] : vector<32x3xf32> to vector<32xf32>
    %190 = vector.shape_cast %189 : vector<32xf32> to vector<32x1xf32>
    %cst_46 = arith.constant 9.99999996E-13 : f32
    %191 = vector.broadcast %cst_46 : f32 to vector<32x1xf32>
    %192 = arith.addf %190, %191 : vector<32x1xf32>
    %193 = math.rsqrt %192 : vector<32x1xf32>
    %194 = vector.broadcast %190 : vector<32x1xf32> to vector<32x32xf32>
    %195 = vector.broadcast %52 : vector<1x32xf32> to vector<32x32xf32>
    %196 = arith.mulf %194, %195 : vector<32x32xf32>
    %197 = vector.extract_strided_slice %187 {offsets = [0, 0], sizes = [32, 1], strides = [1, 1]} : vector<32x3xf32> to vector<32x1xf32>
    %198 = vector.broadcast %197 : vector<32x1xf32> to vector<32x32xf32>
    %199 = vector.broadcast %53 : vector<1x32xf32> to vector<32x32xf32>
    %200 = arith.mulf %198, %199 : vector<32x32xf32>
    %201 = arith.addf %196, %200 : vector<32x32xf32>
    %202 = vector.extract_strided_slice %187 {offsets = [0, 1], sizes = [32, 1], strides = [1, 1]} : vector<32x3xf32> to vector<32x1xf32>
    %203 = vector.broadcast %202 : vector<32x1xf32> to vector<32x32xf32>
    %204 = vector.broadcast %54 : vector<1x32xf32> to vector<32x32xf32>
    %205 = arith.mulf %203, %204 : vector<32x32xf32>
    %206 = arith.addf %201, %205 : vector<32x32xf32>
    %207 = vector.extract_strided_slice %187 {offsets = [0, 2], sizes = [32, 1], strides = [1, 1]} : vector<32x3xf32> to vector<32x1xf32>
    %208 = vector.broadcast %207 : vector<32x1xf32> to vector<32x32xf32>
    %209 = vector.broadcast %55 : vector<1x32xf32> to vector<32x32xf32>
    %210 = arith.mulf %208, %209 : vector<32x32xf32>
    %211 = arith.addf %206, %210 : vector<32x32xf32>
    %212 = arith.addf %19, %185 : vector<32x32xf32>
    %213 = vector.broadcast %193 : vector<32x1xf32> to vector<32x32xf32>
    %214 = arith.mulf %213, %211 : vector<32x32xf32>
    %215 = arith.addf %212, %214 : vector<32x32xf32>
    %216 = arith.negf %215 : vector<32x32xf32>
    %217 = math.exp %216 : vector<32x32xf32>
    %cst_47 = arith.constant 1.000000e+00 : f32
    %218 = vector.broadcast %cst_47 : f32 to vector<32x32xf32>
    %219 = arith.addf %218, %217 : vector<32x32xf32>
    %220 = arith.divf %218, %219 : vector<32x32xf32>
    %221 = arith.mulf %215, %220 : vector<32x32xf32>
    %222 = arith.addf %166, %221 : vector<32x32xf32>
    %cst_48 = arith.constant 1.000000e+30 : f32
    %223 = vector.broadcast %cst_48 : f32 to vector<32x32xf32>
    %224 = arith.select %181, %223, %168 : vector<32x32xi1>, vector<32x32xf32>
    %cst_49 = arith.constant dense<0x7F800000> : vector<32xf32>
    %225 = vector.multi_reduction <minimumf>, %224, %cst_49 [1] : vector<32x32xf32> to vector<32xf32>
    %226 = vector.shape_cast %225 : vector<32xf32> to vector<32x1xf32>
    %227 = vector.broadcast %226 : vector<32x1xf32> to vector<32x32xf32>
    %228 = arith.cmpf ole, %224, %227 : vector<32x32xf32>
    %cst_50 = arith.constant 3.200000e+01 : f32
    %229 = vector.shape_cast %33 : vector<1x32xf32> to vector<1x32xf32>
    %230 = vector.broadcast %229 : vector<1x32xf32> to vector<32x32xf32>
    %231 = vector.broadcast %cst_50 : f32 to vector<32x32xf32>
    %232 = arith.select %228, %230, %231 : vector<32x32xi1>, vector<32x32xf32>
    %cst_51 = arith.constant dense<0x7F800000> : vector<32xf32>
    %233 = vector.multi_reduction <minimumf>, %232, %cst_51 [1] : vector<32x32xf32> to vector<32xf32>
    %234 = vector.shape_cast %233 : vector<32xf32> to vector<32x1xf32>
    %235 = vector.broadcast %33 : vector<1x32xf32> to vector<32x32xf32>
    %236 = vector.broadcast %234 : vector<32x1xf32> to vector<32x32xf32>
    %237 = arith.cmpf oeq, %235, %236 : vector<32x32xf32>
    %238 = arith.extui %237 : vector<32x32xi1> to vector<32x32xi32>
    %239 = arith.sitofp %238 : vector<32x32xi32> to vector<32x32xf32>
    %cst_52 = arith.constant dense<0.000000e+00> : vector<32x35xf32>
    %240 = tpu.matmul %239, %22, %cst_52 {dimension_numbers = #tpu.dot_dimension_numbers<[1], [0], [0], [1], [0, 0, 1, 1], [], []>} : vector<32x32xf32>, vector<32x35xf32>, vector<32x35xf32> -> vector<32x35xf32>
    %241 = vector.extract_strided_slice %240 {offsets = [0, 0], sizes = [32, 32], strides = [1, 1]} : vector<32x35xf32> to vector<32x32xf32>
    %242 = vector.extract_strided_slice %240 {offsets = [0, 32], sizes = [32, 3], strides = [1, 1]} : vector<32x35xf32> to vector<32x3xf32>
    %243 = arith.subf %242, %4 : vector<32x3xf32>
    %244 = arith.mulf %243, %243 : vector<32x3xf32>
    %cst_53 = arith.constant dense<0.000000e+00> : vector<32xf32>
    %245 = vector.multi_reduction <add>, %244, %cst_53 [1] : vector<32x3xf32> to vector<32xf32>
    %246 = vector.shape_cast %245 : vector<32xf32> to vector<32x1xf32>
    %cst_54 = arith.constant 9.99999996E-13 : f32
    %247 = vector.broadcast %cst_54 : f32 to vector<32x1xf32>
    %248 = arith.addf %246, %247 : vector<32x1xf32>
    %249 = math.rsqrt %248 : vector<32x1xf32>
    %250 = vector.broadcast %246 : vector<32x1xf32> to vector<32x32xf32>
    %251 = vector.broadcast %52 : vector<1x32xf32> to vector<32x32xf32>
    %252 = arith.mulf %250, %251 : vector<32x32xf32>
    %253 = vector.extract_strided_slice %243 {offsets = [0, 0], sizes = [32, 1], strides = [1, 1]} : vector<32x3xf32> to vector<32x1xf32>
    %254 = vector.broadcast %253 : vector<32x1xf32> to vector<32x32xf32>
    %255 = vector.broadcast %53 : vector<1x32xf32> to vector<32x32xf32>
    %256 = arith.mulf %254, %255 : vector<32x32xf32>
    %257 = arith.addf %252, %256 : vector<32x32xf32>
    %258 = vector.extract_strided_slice %243 {offsets = [0, 1], sizes = [32, 1], strides = [1, 1]} : vector<32x3xf32> to vector<32x1xf32>
    %259 = vector.broadcast %258 : vector<32x1xf32> to vector<32x32xf32>
    %260 = vector.broadcast %54 : vector<1x32xf32> to vector<32x32xf32>
    %261 = arith.mulf %259, %260 : vector<32x32xf32>
    %262 = arith.addf %257, %261 : vector<32x32xf32>
    %263 = vector.extract_strided_slice %243 {offsets = [0, 2], sizes = [32, 1], strides = [1, 1]} : vector<32x3xf32> to vector<32x1xf32>
    %264 = vector.broadcast %263 : vector<32x1xf32> to vector<32x32xf32>
    %265 = vector.broadcast %55 : vector<1x32xf32> to vector<32x32xf32>
    %266 = arith.mulf %264, %265 : vector<32x32xf32>
    %267 = arith.addf %262, %266 : vector<32x32xf32>
    %268 = arith.addf %19, %241 : vector<32x32xf32>
    %269 = vector.broadcast %249 : vector<32x1xf32> to vector<32x32xf32>
    %270 = arith.mulf %269, %267 : vector<32x32xf32>
    %271 = arith.addf %268, %270 : vector<32x32xf32>
    %272 = arith.negf %271 : vector<32x32xf32>
    %273 = math.exp %272 : vector<32x32xf32>
    %cst_55 = arith.constant 1.000000e+00 : f32
    %274 = vector.broadcast %cst_55 : f32 to vector<32x32xf32>
    %275 = arith.addf %274, %273 : vector<32x32xf32>
    %276 = arith.divf %274, %275 : vector<32x32xf32>
    %277 = arith.mulf %271, %276 : vector<32x32xf32>
    %278 = arith.addf %222, %277 : vector<32x32xf32>
    %cst_56 = arith.constant 1.000000e+30 : f32
    %279 = vector.broadcast %cst_56 : f32 to vector<32x32xf32>
    %280 = arith.select %237, %279, %224 : vector<32x32xi1>, vector<32x32xf32>
    %cst_57 = arith.constant dense<0x7F800000> : vector<32xf32>
    %281 = vector.multi_reduction <minimumf>, %280, %cst_57 [1] : vector<32x32xf32> to vector<32xf32>
    %282 = vector.shape_cast %281 : vector<32xf32> to vector<32x1xf32>
    %283 = vector.broadcast %282 : vector<32x1xf32> to vector<32x32xf32>
    %284 = arith.cmpf ole, %280, %283 : vector<32x32xf32>
    %cst_58 = arith.constant 3.200000e+01 : f32
    %285 = vector.shape_cast %33 : vector<1x32xf32> to vector<1x32xf32>
    %286 = vector.broadcast %285 : vector<1x32xf32> to vector<32x32xf32>
    %287 = vector.broadcast %cst_58 : f32 to vector<32x32xf32>
    %288 = arith.select %284, %286, %287 : vector<32x32xi1>, vector<32x32xf32>
    %cst_59 = arith.constant dense<0x7F800000> : vector<32xf32>
    %289 = vector.multi_reduction <minimumf>, %288, %cst_59 [1] : vector<32x32xf32> to vector<32xf32>
    %290 = vector.shape_cast %289 : vector<32xf32> to vector<32x1xf32>
    %291 = vector.broadcast %33 : vector<1x32xf32> to vector<32x32xf32>
    %292 = vector.broadcast %290 : vector<32x1xf32> to vector<32x32xf32>
    %293 = arith.cmpf oeq, %291, %292 : vector<32x32xf32>
    %294 = arith.extui %293 : vector<32x32xi1> to vector<32x32xi32>
    %295 = arith.sitofp %294 : vector<32x32xi32> to vector<32x32xf32>
    %cst_60 = arith.constant dense<0.000000e+00> : vector<32x35xf32>
    %296 = tpu.matmul %295, %22, %cst_60 {dimension_numbers = #tpu.dot_dimension_numbers<[1], [0], [0], [1], [0, 0, 1, 1], [], []>} : vector<32x32xf32>, vector<32x35xf32>, vector<32x35xf32> -> vector<32x35xf32>
    %297 = vector.extract_strided_slice %296 {offsets = [0, 0], sizes = [32, 32], strides = [1, 1]} : vector<32x35xf32> to vector<32x32xf32>
    %298 = vector.extract_strided_slice %296 {offsets = [0, 32], sizes = [32, 3], strides = [1, 1]} : vector<32x35xf32> to vector<32x3xf32>
    %299 = arith.subf %298, %4 : vector<32x3xf32>
    %300 = arith.mulf %299, %299 : vector<32x3xf32>
    %cst_61 = arith.constant dense<0.000000e+00> : vector<32xf32>
    %301 = vector.multi_reduction <add>, %300, %cst_61 [1] : vector<32x3xf32> to vector<32xf32>
    %302 = vector.shape_cast %301 : vector<32xf32> to vector<32x1xf32>
    %cst_62 = arith.constant 9.99999996E-13 : f32
    %303 = vector.broadcast %cst_62 : f32 to vector<32x1xf32>
    %304 = arith.addf %302, %303 : vector<32x1xf32>
    %305 = math.rsqrt %304 : vector<32x1xf32>
    %306 = vector.broadcast %302 : vector<32x1xf32> to vector<32x32xf32>
    %307 = vector.broadcast %52 : vector<1x32xf32> to vector<32x32xf32>
    %308 = arith.mulf %306, %307 : vector<32x32xf32>
    %309 = vector.extract_strided_slice %299 {offsets = [0, 0], sizes = [32, 1], strides = [1, 1]} : vector<32x3xf32> to vector<32x1xf32>
    %310 = vector.broadcast %309 : vector<32x1xf32> to vector<32x32xf32>
    %311 = vector.broadcast %53 : vector<1x32xf32> to vector<32x32xf32>
    %312 = arith.mulf %310, %311 : vector<32x32xf32>
    %313 = arith.addf %308, %312 : vector<32x32xf32>
    %314 = vector.extract_strided_slice %299 {offsets = [0, 1], sizes = [32, 1], strides = [1, 1]} : vector<32x3xf32> to vector<32x1xf32>
    %315 = vector.broadcast %314 : vector<32x1xf32> to vector<32x32xf32>
    %316 = vector.broadcast %54 : vector<1x32xf32> to vector<32x32xf32>
    %317 = arith.mulf %315, %316 : vector<32x32xf32>
    %318 = arith.addf %313, %317 : vector<32x32xf32>
    %319 = vector.extract_strided_slice %299 {offsets = [0, 2], sizes = [32, 1], strides = [1, 1]} : vector<32x3xf32> to vector<32x1xf32>
    %320 = vector.broadcast %319 : vector<32x1xf32> to vector<32x32xf32>
    %321 = vector.broadcast %55 : vector<1x32xf32> to vector<32x32xf32>
    %322 = arith.mulf %320, %321 : vector<32x32xf32>
    %323 = arith.addf %318, %322 : vector<32x32xf32>
    %324 = arith.addf %19, %297 : vector<32x32xf32>
    %325 = vector.broadcast %305 : vector<32x1xf32> to vector<32x32xf32>
    %326 = arith.mulf %325, %323 : vector<32x32xf32>
    %327 = arith.addf %324, %326 : vector<32x32xf32>
    %328 = arith.negf %327 : vector<32x32xf32>
    %329 = math.exp %328 : vector<32x32xf32>
    %cst_63 = arith.constant 1.000000e+00 : f32
    %330 = vector.broadcast %cst_63 : f32 to vector<32x32xf32>
    %331 = arith.addf %330, %329 : vector<32x32xf32>
    %332 = arith.divf %330, %331 : vector<32x32xf32>
    %333 = arith.mulf %327, %332 : vector<32x32xf32>
    %334 = arith.addf %278, %333 : vector<32x32xf32>
    %cst_64 = arith.constant 2.000000e-01 : f32
    %335 = vector.broadcast %cst_64 : f32 to vector<32x32xf32>
    %336 = arith.mulf %334, %335 : vector<32x32xf32>
    %337 = vector.broadcast %9 : vector<1x32xf32> to vector<32x32xf32>
    %338 = arith.addf %21, %337 : vector<32x32xf32>
    %c0_65 = arith.constant 0 : index
    %c0_66 = arith.constant 0 : index
    %339 = vector.load %arg6[%c0_65, %c0_66] : memref<32x32xf32, #tpu.memory_space<vmem>>, vector<32x32xf32>
    %cst_67 = arith.constant dense<0.000000e+00> : vector<32x32xf32>
    %340 = tpu.matmul %336, %339, %cst_67 {dimension_numbers = #tpu.dot_dimension_numbers<[1], [0], [0], [1], [0, 0, 1, 1], [], []>} : vector<32x32xf32>, vector<32x32xf32>, vector<32x32xf32> -> vector<32x32xf32>
    %341 = arith.addf %338, %340 : vector<32x32xf32>
    %342 = arith.negf %341 : vector<32x32xf32>
    %343 = math.exp %342 : vector<32x32xf32>
    %cst_68 = arith.constant 1.000000e+00 : f32
    %344 = vector.broadcast %cst_68 : f32 to vector<32x32xf32>
    %345 = arith.addf %344, %343 : vector<32x32xf32>
    %346 = arith.divf %344, %345 : vector<32x32xf32>
    %347 = arith.mulf %341, %346 : vector<32x32xf32>
    %348 = vector.shape_cast %347 : vector<32x32xf32> to vector<2x16x32xf32>
    %cst_69 = arith.constant dense<0.000000e+00> : vector<2x32xf32>
    %349 = vector.multi_reduction <add>, %348, %cst_69 [1] : vector<2x16x32xf32> to vector<2x32xf32>
    %cst_70 = arith.constant 6.250000e-02 : f32
    %350 = vector.broadcast %cst_70 : f32 to vector<2x32xf32>
    %351 = arith.mulf %349, %350 : vector<2x32xf32>
    %c0_71 = arith.constant 0 : index
    %c0_72 = arith.constant 0 : index
    %352 = vector.load %arg7[%c0_71, %c0_72] : memref<32x64xf32, #tpu.memory_space<vmem>>, vector<32x64xf32>
    %cst_73 = arith.constant dense<0.000000e+00> : vector<2x64xf32>
    %353 = tpu.matmul %351, %352, %cst_73 {dimension_numbers = #tpu.dot_dimension_numbers<[1], [0], [0], [1], [0, 0, 1, 1], [], []>} : vector<2x32xf32>, vector<32x64xf32>, vector<2x64xf32> -> vector<2x64xf32>
    %c0_74 = arith.constant 0 : index
    %c0_75 = arith.constant 0 : index
    %354 = vector.load %arg11[%c0_74, %c0_75] : memref<1x64xf32, #tpu.memory_space<vmem>>, vector<1x64xf32>
    %355 = vector.broadcast %354 : vector<1x64xf32> to vector<2x64xf32>
    %356 = arith.addf %353, %355 : vector<2x64xf32>
    %cst_76 = arith.constant 0.000000e+00 : f32
    %357 = vector.broadcast %cst_76 : f32 to vector<2x64xf32>
    %358 = arith.maximumf %356, %357 : vector<2x64xf32>
    %c0_77 = arith.constant 0 : index
    %c0_78 = arith.constant 0 : index
    %359 = vector.load %arg8[%c0_77, %c0_78] : memref<64x32xf32, #tpu.memory_space<vmem>>, vector<64x32xf32>
    %cst_79 = arith.constant dense<0.000000e+00> : vector<2x32xf32>
    %360 = tpu.matmul %358, %359, %cst_79 {dimension_numbers = #tpu.dot_dimension_numbers<[1], [0], [0], [1], [0, 0, 1, 1], [], []>} : vector<2x64xf32>, vector<64x32xf32>, vector<2x32xf32> -> vector<2x32xf32>
    %361 = vector.broadcast %10 : vector<1x32xf32> to vector<2x32xf32>
    %362 = arith.addf %360, %361 : vector<2x32xf32>
    %cst_80 = arith.constant 0.000000e+00 : f32
    %363 = vector.broadcast %cst_80 : f32 to vector<2x32xf32>
    %364 = arith.maximumf %362, %363 : vector<2x32xf32>
    %c0_81 = arith.constant 0 : index
    %c0_82 = arith.constant 0 : index
    %365 = vector.load %arg9[%c0_81, %c0_82] : memref<32x1xf32, #tpu.memory_space<vmem>>, vector<32x1xf32>
    %cst_83 = arith.constant dense<0.000000e+00> : vector<2x1xf32>
    %366 = tpu.matmul %364, %365, %cst_83 {dimension_numbers = #tpu.dot_dimension_numbers<[1], [0], [0], [1], [0, 0, 1, 1], [], []>} : vector<2x32xf32>, vector<32x1xf32>, vector<2x1xf32> -> vector<2x1xf32>
    %c0_84 = arith.constant 0 : index
    %c0_85 = arith.constant 0 : index
    %367 = vector.load %arg12[%c0_84, %c0_85] : memref<1x1xf32, #tpu.memory_space<vmem>>, vector<1x1xf32>
    %368 = vector.broadcast %367 : vector<1x1xf32> to vector<2x1xf32>
    %369 = arith.addf %366, %368 : vector<2x1xf32>
    %370 = vector.shape_cast %369 : vector<2x1xf32> to vector<1x2x1xf32>
    %c0_86 = arith.constant 0 : index
    %c0_87 = arith.constant 0 : index
    %c0_88 = arith.constant 0 : index
    %371 = vector.load %arg13[%c0_86, %c0_87, %c0_88] : memref<1x2x1xf32, #tpu.memory_space<vmem>>, vector<1x2x1xf32>
    tpu.vector_store %arg13[%c0_86, %c0_87, %c0_88], %370 {strides = array<i32>} : memref<1x2x1xf32, #tpu.memory_space<vmem>>, vector<1x2x1xf32>,
    return
  }
  func.func @transform_0(%arg0: i32) -> (i32, i32, i32) {
    %c0_i32 = arith.constant 0 : i32
    %c0_i32_0 = arith.constant 0 : i32
    %c0_i32_1 = arith.constant 0 : i32
    return %arg0, %c0_i32, %c0_i32_0 : i32, i32, i32
  }
  func.func @transform_1(%arg0: i32) -> (i32, i32, i32) {
    %c0_i32 = arith.constant 0 : i32
    %c0_i32_0 = arith.constant 0 : i32
    %c0_i32_1 = arith.constant 0 : i32
    return %arg0, %c0_i32, %c0_i32_0 : i32, i32, i32
  }
  func.func @transform_2(%arg0: i32) -> (i32, i32) {
    %c0_i32 = arith.constant 0 : i32
    %c0_i32_0 = arith.constant 0 : i32
    %c0_i32_1 = arith.constant 0 : i32
    return %c0_i32, %c0_i32_0 : i32, i32
  }
  func.func @transform_3(%arg0: i32) -> (i32, i32) {
    %c0_i32 = arith.constant 0 : i32
    %c0_i32_0 = arith.constant 0 : i32
    %c0_i32_1 = arith.constant 0 : i32
    return %c0_i32, %c0_i32_0 : i32, i32
  }
  func.func @transform_4(%arg0: i32) -> (i32, i32) {
    %c0_i32 = arith.constant 0 : i32
    %c0_i32_0 = arith.constant 0 : i32
    %c0_i32_1 = arith.constant 0 : i32
    return %c0_i32, %c0_i32_0 : i32, i32
  }
  func.func @transform_5(%arg0: i32) -> (i32, i32) {
    %c0_i32 = arith.constant 0 : i32
    %c0_i32_0 = arith.constant 0 : i32
    %c0_i32_1 = arith.constant 0 : i32
    return %c0_i32, %c0_i32_0 : i32, i32
  }
  func.func @transform_6(%arg0: i32) -> (i32, i32) {
    %c0_i32 = arith.constant 0 : i32
    %c0_i32_0 = arith.constant 0 : i32
    %c0_i32_1 = arith.constant 0 : i32
    return %c0_i32, %c0_i32_0 : i32, i32
  }
  func.func @transform_7(%arg0: i32) -> (i32, i32) {
    %c0_i32 = arith.constant 0 : i32
    %c0_i32_0 = arith.constant 0 : i32
    %c0_i32_1 = arith.constant 0 : i32
    return %c0_i32, %c0_i32_0 : i32, i32
  }
  func.func @transform_8(%arg0: i32) -> (i32, i32) {
    %c0_i32 = arith.constant 0 : i32
    %c0_i32_0 = arith.constant 0 : i32
    %c0_i32_1 = arith.constant 0 : i32
    return %c0_i32, %c0_i32_0 : i32, i32
  }
  func.func @transform_9(%arg0: i32) -> (i32, i32) {
    %c0_i32 = arith.constant 0 : i32
    %c0_i32_0 = arith.constant 0 : i32
    %c0_i32_1 = arith.constant 0 : i32
    return %c0_i32, %c0_i32_0 : i32, i32
  }
  func.func @transform_10(%arg0: i32) -> (i32, i32) {
    %c0_i32 = arith.constant 0 : i32
    %c0_i32_0 = arith.constant 0 : i32
    %c0_i32_1 = arith.constant 0 : i32
    return %c0_i32, %c0_i32_0 : i32, i32
  }
  func.func @transform_11(%arg0: i32) -> (i32, i32) {
    %c0_i32 = arith.constant 0 : i32
    %c0_i32_0 = arith.constant 0 : i32
    %c0_i32_1 = arith.constant 0 : i32
    return %c0_i32, %c0_i32_0 : i32, i32
  }
  func.func @transform_12(%arg0: i32) -> (i32, i32, i32) {
    %c0_i32 = arith.constant 0 : i32
    %c0_i32_0 = arith.constant 0 : i32
    %c0_i32_1 = arith.constant 0 : i32
    return %arg0, %c0_i32, %c0_i32_0 : i32, i32, i32
  }
}

</mosaic_0001>

<llo_original>
// kernel: model_forward.1
$region0: #{model_forward.1}
  #allocation0 [shape = 'u32[]', space=smem, size = 0x4, offset = 0x4, fixed_abs, tag = 'smem constant byte address 0x4 - core index']
  #allocation1 [shape = 'u32[72,128]{1,0:T(1,128)}', space=vmem, size = 0x9000, scoped, tag = 'internal scratch']
  #allocation2 [shape = 'f32[1,1]{1,0:T(1,128)S(1)}', space=vmem, size = 0x200, scoped, tag = 'scoped memory for model_forward.1']
  %s0 = inlined_call_operand.vmem [shape: f32[2,16,3], index: 0, kind: input, shape index: {}]
  %s1 = inlined_call_operand.vmem [shape: f32[2,16,4], index: 1, kind: input, shape index: {}]
  %s2 = inlined_call_operand.vmem [shape: f32[4,32], index: 2, kind: input, shape index: {}]
  %s3 = inlined_call_operand.vmem [shape: f32[32,96], index: 3, kind: input, shape index: {}]
  %s4 = inlined_call_operand.vmem [shape: f32[4,32], index: 4, kind: input, shape index: {}]
  %s5 = inlined_call_operand.vmem [shape: f32[32,32], index: 5, kind: input, shape index: {}]
  %s6 = inlined_call_operand.vmem [shape: f32[32,64], index: 6, kind: input, shape index: {}]
  %s7 = inlined_call_operand.vmem [shape: f32[64,32], index: 7, kind: input, shape index: {}]
  %s8 = inlined_call_operand.vmem [shape: f32[32,1], index: 8, kind: input, shape index: {}]
  %s9 = inlined_call_operand.vmem [shape: f32[4,32], index: 9, kind: input, shape index: {}]
  %s10 = inlined_call_operand.vmem [shape: f32[1,64], index: 10, kind: input, shape index: {}]
  %s11 = inlined_call_operand.<no memory space> [shape: f32[1,1], index: 11, kind: input, shape index: {}]
  %s12 = inlined_call_operand.vmem [shape: f32[1,2,1], index: 12, kind: output, shape index: {}]
  %s13 = sld [smem:[#allocation0]]
  $region58: #{model_forward.1} parent=0
    _
  %s15 = ssub.s32 1, %s13
  %s16 = scalar_select 0, %s15, %s13
  %v17 = vstv %s11
  %18 = vst [vmem:[#allocation2] sm:$0x1] %v17
  // Predicated region
  $region2: #{model_forward.1} parent=0 // pred_check
    _
  $region3: #{model_forward.1} parent=0 // pred_check_branch
    %20 = sbr.rel (0) target = $region5
  $region4: #{model_forward.1} parent=0 // pred_region
    _
  $region5: #{model_forward.1} parent=0 // pred_fallthru
    _
  // Predicated region
  $region6: #{model_forward.1} parent=0 // pred_check
    _
  $region7: #{model_forward.1} parent=0 // pred_check_branch
    %22 = sbr.rel (0) target = $region9
  $region8: #{model_forward.1} parent=0 // pred_region
    _
  $region9: #{model_forward.1} parent=0 // pred_fallthru
    _
  // Predicated region
  $region10: #{model_forward.1} parent=0 // pred_check
    _
  $region11: #{model_forward.1} parent=0 // pred_check_branch
    %24 = sbr.rel (0) target = $region13
  $region12: #{model_forward.1} parent=0 // pred_region
    _
  $region13: #{model_forward.1} parent=0 // pred_fallthru
    _
  // Predicated region
  $region14: #{model_forward.1} parent=0 // pred_check
    _
  $region15: #{model_forward.1} parent=0 // pred_check_branch
    %26 = sbr.rel (0) target = $region17
  $region16: #{model_forward.1} parent=0 // pred_region
    _
  $region17: #{model_forward.1} parent=0 // pred_fallthru
    _
  // Predicated region
  $region18: #{model_forward.1} parent=0 // pred_check
    _
  $region19: #{model_forward.1} parent=0 // pred_check_branch
    %28 = sbr.rel (0) target = $region21
  $region20: #{model_forward.1} parent=0 // pred_region
    _
  $region21: #{model_forward.1} parent=0 // pred_fallthru
    _
  // Predicated region
  $region22: #{model_forward.1} parent=0 // pred_check
    _
  $region23: #{model_forward.1} parent=0 // pred_check_branch
    %30 = sbr.rel (0) target = $region25
  $region24: #{model_forward.1} parent=0 // pred_region
    _
  $region25: #{model_forward.1} parent=0 // pred_fallthru
    _
  // Predicated region
  $region26: #{model_forward.1} parent=0 // pred_check
    _
  $region27: #{model_forward.1} parent=0 // pred_check_branch
    %32 = sbr.rel (0) target = $region29
  $region28: #{model_forward.1} parent=0 // pred_region
    _
  $region29: #{model_forward.1} parent=0 // pred_fallthru
    _
  // Predicated region
  $region30: #{model_forward.1} parent=0 // pred_check
    _
  $region31: #{model_forward.1} parent=0 // pred_check_branch
    %34 = sbr.rel (0) target = $region33
  $region32: #{model_forward.1} parent=0 // pred_region
    _
  $region33: #{model_forward.1} parent=0 // pred_fallthru
    _
  // Predicated region
  $region34: #{model_forward.1} parent=0 // pred_check
    _
  $region35: #{model_forward.1} parent=0 // pred_check_branch
    %36 = sbr.rel (0) target = $region37
  $region36: #{model_forward.1} parent=0 // pred_region
    _
  $region37: #{model_forward.1} parent=0 // pred_fallthru
    _
  // Predicated region
  $region38: #{model_forward.1} parent=0 // pred_check
    _
  $region39: #{model_forward.1} parent=0 // pred_check_branch
    %38 = sbr.rel (0) target = $region41
  $region40: #{model_forward.1} parent=0 // pred_region
    _
  $region41: #{model_forward.1} parent=0 // pred_fallthru
    _
  // Predicated region
  $region42: #{model_forward.1} parent=0 // pred_check
    _
  $region43: #{model_forward.1} parent=0 // pred_check_branch
    %40 = sbr.rel (0) target = $region45
  $region44: #{model_forward.1} parent=0 // pred_region
    _
  $region45: #{model_forward.1} parent=0 // pred_fallthru
    _
  // Predicated region
  $region46: #{model_forward.1} parent=0 // pred_check
    _
  $region47: #{model_forward.1} parent=0 // pred_check_branch
    %42 = sbr.rel (0) target = $region49
  $region48: #{model_forward.1} parent=0 // pred_region
    _
  $region49: #{model_forward.1} parent=0 // pred_fallthru
    _
  %v43 = vld [vmem:[%s0] sm:$0xff]
  %v44 = vld [vmem:[%s0 + $0x8] sm:$0xff]
  %v45 = vld [vmem:[%s0 + $0x10] sm:$0xff]
  %v46 = vld [vmem:[%s0 + $0x18] sm:$0xff]
  %v47 = vmul.f32 %v43, 5.0
  %v48 = vmul.f32 %v44, 5.0
  %v49 = vmul.f32 %v45, 5.0
  %v50 = vmul.f32 %v46, 5.0
  %v51 = vld [vmem:[%s1] sm:$0xff]
  %v52 = vld [vmem:[%s1 + $0x8] sm:$0xff]
  %v53 = vld [vmem:[%s1 + $0x10] sm:$0xff]
  %v54 = vld [vmem:[%s1 + $0x18] sm:$0xff]
  %v55 = vld [vmem:[%s9] sm:$0xf]
  %v56 = vld [vmem:[%s2] sm:$0xf]
  %v57 = vperm.slane %v55, 0
  %vm58 = vcmask 31744
  %v60 = vsel %vm58, %v51, 0
  %v63 = vsel %vm58, %v52, 0
  %v66 = vsel %vm58, %v53, 0
  %v69 = vsel %vm58, %v54, 0
  %vm71 = vcmask 1043456
  %v73 = vsel %vm71, %v56, 0
  %75 = vmatpush.msra.mxu0 0.0
  %76 = vmatpush.msra.mxu0 0.0
  %77 = vmatpush.msra.mxu0 0.0
  %78 = vmatpush.msra.mxu0 0.0
  %79 = vmatpush.msra.mxu0 0.0
  %80 = vmatpush.msra.mxu0 0.0
  %81 = vmatpush.msra.mxu0 0.0
  %82 = vmatpush.msra.mxu0 0.0
  %83 = vmatpush.msra.mxu0 0.0
  %84 = vmatpush.msra.mxu0 0.0
  %85 = vmatpush.msra.mxu0 0.0
  %86 = vmatpush.msra.mxu0 0.0
  %87 = vmatpush.msra.mxu0 0.0
  %88 = vmatpush.msra.mxu0 0.0
  %89 = vmatpush.msra.mxu0 0.0
  %90 = vmatpush.msra.mxu0 %v73
  %91 = vmatmul.f32.gmra.mxu0 %v60
  %v92 = vpop.f32.mrf.mxu0
  %v93 = vadd.f32 %v57, %v92
  %94 = vmatmul.f32.gmra.mxu0 %v63
  %v95 = vpop.f32.mrf.mxu0
  %v96 = vadd.f32 %v57, %v95
  %97 = vmatmul.f32.gmra.mxu0 %v66
  %v98 = vpop.f32.mrf.mxu0
  %v99 = vadd.f32 %v57, %v98
  %100 = vmatmul.f32.gmra.mxu0 %v69
  %v101 = vpop.f32.mrf.mxu0
  %v102 = vadd.f32 %v57, %v101
  %103 = vdwg.mxu0
  %v104 = vld [vmem:[%s3] sm:$0xff]
  %v105 = vld [vmem:[%s3 + $0x8] sm:$0xff]
  %v106 = vld [vmem:[%s3 + $0x10] sm:$0xff]
  %v107 = vld [vmem:[%s3 + $0x18] sm:$0xff]
  %vm108 = vcmask 261120
  %v110 = vsel %vm108, %v93, 0
  %v113 = vsel %vm108, %v96, 0
  %v116 = vsel %vm108, %v99, 0
  %v119 = vsel %vm108, %v102, 0
  %121 = vmatpush.msra.mxu0 0.0
  %122 = vmatpush.msra.mxu0 0.0
  %123 = vmatpush.msra.mxu0 0.0
  %124 = vmatpush.msra.mxu0 0.0
  %125 = vmatpush.msra.mxu0 0.0
  %126 = vmatpush.msra.mxu0 0.0
  %127 = vmatpush.msra.mxu0 0.0
  %128 = vmatpush.msra.mxu0 0.0
  %129 = vmatpush.msra.mxu0 0.0
  %130 = vmatpush.msra.mxu0 0.0
  %131 = vmatpush.msra.mxu0 0.0
  %132 = vmatpush.msra.mxu0 0.0
  %133 = vmatpush.msra.mxu0 %v107
  %134 = vmatpush.msra.mxu0 %v106
  %135 = vmatpush.msra.mxu0 %v105
  %136 = vmatpush.msra.mxu0 %v104
  %137 = vmatmul.f32.gmra.mxu0 %v110
  %v138 = vpop.f32.mrf.mxu0
  %v139 = vadd.f32 0.0, %v138
  %140 = vmatmul.f32.gmra.mxu0 %v113
  %v141 = vpop.f32.mrf.mxu0
  %v142 = vadd.f32 0.0, %v141
  %143 = vmatmul.f32.gmra.mxu0 %v116
  %v144 = vpop.f32.mrf.mxu0
  %v145 = vadd.f32 0.0, %v144
  %146 = vmatmul.f32.gmra.mxu0 %v119
  %v147 = vpop.f32.mrf.mxu0
  %v148 = vadd.f32 0.0, %v147
  %149 = vdwg.mxu0
  %v150 = vperm.slane %v55, 1
  %v151 = vadd.f32 %v139, %v150
  %v152 = vadd.f32 %v142, %v150
  %v153 = vadd.f32 %v145, %v150
  %v154 = vadd.f32 %v148, %v150
  %159 = vrot.lane.b32.xlu0 %v139, 96
  %v160 = vpop.permute.xlu0 %159
  %161 = vrot.lane.b32.xlu0 %v142, 96
  %v162 = vpop.permute.xlu0 %161
  %163 = vrot.lane.b32.xlu0 %v145, 96
  %v164 = vpop.permute.xlu0 %163
  %165 = vrot.lane.b32.xlu0 %v148, 96
  %v166 = vpop.permute.xlu0 %165
  %175 = vrot.lane.b32.xlu0 %v47, 32
  %v176 = vpop.permute.xlu0 %175
  %177 = vrot.lane.b32.xlu0 %v48, 32
  %v178 = vpop.permute.xlu0 %177
  %179 = vrot.lane.b32.xlu0 %v49, 32
  %v180 = vpop.permute.xlu0 %179
  %181 = vrot.lane.b32.xlu0 %v50, 32
  %v182 = vpop.permute.xlu0 %181
  %v187 = vsel %vm108, %v160, %v176
  %v188 = vsel %vm108, %v162, %v178
  %v189 = vsel %vm108, %v164, %v180
  %v190 = vsel %vm108, %v166, %v182
  %v191 = vmul.f32 %v47, %v47
  %v192 = vmul.f32 %v48, %v48
  %v193 = vmul.f32 %v49, %v49
  %v194 = vmul.f32 %v50, %v50
  %vm195 = vcmask 23552
  %v196 = vsel %vm195, %v191, 0.0
  %197 = vadd.xlane.f32.xlu0 %v196
  %v198 = vpop.xlane.xlu0 %197
  %v199 = vsel %vm195, %v192, 0.0
  %200 = vadd.xlane.f32.xlu0 %v199
  %v201 = vpop.xlane.xlu0 %200
  %v202 = vsel %vm195, %v193, 0.0
  %203 = vadd.xlane.f32.xlu0 %v202
  %v204 = vpop.xlane.xlu0 %203
  %v205 = vsel %vm195, %v194, 0.0
  %206 = vadd.xlane.f32.xlu0 %v205
  %v207 = vpop.xlane.xlu0 %206
  %v208 = vmul.f32 %v47, -2.0
  %v209 = vmul.f32 %v48, -2.0
  %v210 = vmul.f32 %v49, -2.0
  %v211 = vmul.f32 %v50, -2.0
  %216 = vrot.lane.b32.xlu0 %v208, 1
  %v217 = vpop.permute.xlu0 %216
  %218 = vrot.lane.b32.xlu0 %v209, 1
  %v219 = vpop.permute.xlu0 %218
  %220 = vrot.lane.b32.xlu0 %v210, 1
  %v221 = vpop.permute.xlu0 %220
  %222 = vrot.lane.b32.xlu0 %v211, 1
  %v223 = vpop.permute.xlu0 %222
  %vm228 = vcmask 7168
  %v229 = vsel %vm228, 1.0, %v217
  %v230 = vsel %vm228, 1.0, %v219
  %v231 = vsel %vm228, 1.0, %v221
  %v232 = vsel %vm228, 1.0, %v223
  %233 = vrot.lane.b32.xlu0 %v47, 1
  %v234 = vpop.permute.xlu0 %233
  %235 = vrot.lane.b32.xlu0 %v48, 1
  %v236 = vpop.permute.xlu0 %235
  %237 = vrot.lane.b32.xlu0 %v49, 1
  %v238 = vpop.permute.xlu0 %237
  %239 = vrot.lane.b32.xlu0 %v50, 1
  %v240 = vpop.permute.xlu0 %239
  %v245 = vsel %vm228, %v198, %v234
  %v246 = vsel %vm228, %v201, %v236
  %v247 = vsel %vm228, %v204, %v238
  %v248 = vsel %vm228, %v207, %v240
  %v250 = vsel %vm58, %v229, 0
  %v253 = vsel %vm58, %v230, 0
  %v256 = vsel %vm58, %v231, 0
  %v259 = vsel %vm58, %v232, 0
  %v262 = vsel %vm58, %v245, 0
  %v265 = vsel %vm58, %v246, 0
  %v268 = vsel %vm58, %v247, 0
  %v271 = vsel %vm58, %v248, 0
  %273 = vmatpush.xpose.msra.mxu0 0.0
  %274 = vmatpush.xpose.msra.mxu0 0.0
  %275 = vmatpush.xpose.msra.mxu0 0.0
  %276 = vmatpush.xpose.msra.mxu0 0.0
  %277 = vmatpush.xpose.msra.mxu0 0.0
  %278 = vmatpush.xpose.msra.mxu0 0.0
  %279 = vmatpush.xpose.msra.mxu0 0.0
  %280 = vmatpush.xpose.msra.mxu0 0.0
  %281 = vmatpush.xpose.msra.mxu0 0.0
  %282 = vmatpush.xpose.msra.mxu0 0.0
  %283 = vmatpush.xpose.msra.mxu0 0.0
  %284 = vmatpush.xpose.msra.mxu0 0.0
  %285 = vmatpush.xpose.msra.mxu0 %v271
  %286 = vmatpush.xpose.msra.mxu0 %v268
  %287 = vmatpush.xpose.msra.mxu0 %v265
  %288 = vmatpush.xpose.msra.mxu0 %v262
  %289 = vmatmul.f32.gmra.mxu0 %v250
  %v290 = vpop.f32.mrf.mxu0
  %v291 = vadd.f32 0.0, %v290
  %292 = vmatmul.f32.gmra.mxu0 %v253
  %v293 = vpop.f32.mrf.mxu0
  %v294 = vadd.f32 0.0, %v293
  %295 = vmatmul.f32.gmra.mxu0 %v256
  %v296 = vpop.f32.mrf.mxu0
  %v297 = vadd.f32 0.0, %v296
  %298 = vmatmul.f32.gmra.mxu0 %v259
  %v299 = vpop.f32.mrf.mxu0
  %v300 = vadd.f32 0.0, %v299
  %301 = vdwg.mxu0
  %v302 = vlaneseq
  %v303 = vand.u32 %v302, 127
  %v304 = vcvt.s32.f32 %v303
  %v305 = vlaneseq
  %v306 = vshrl.u32 %v305, 7
  %v307 = vadd.s32 %v306, 8
  %v308 = vadd.s32 %v306, 16
  %v309 = vadd.s32 %v306, 24
  %v310 = vcvt.s32.f32 %v306
  %v311 = vcvt.s32.f32 %v307
  %v312 = vcvt.s32.f32 %v308
  %v313 = vcvt.s32.f32 %v309
  %v314 = vadd.f32 %v310, 0.5
  %v315 = vadd.f32 %v311, 0.5
  %v316 = vadd.f32 %v312, 0.5
  %v317 = vadd.f32 %v313, 0.5
  %v318 = vmul.f32 %v314, 0.0625
  %v319 = vmul.f32 %v315, 0.0625
  %v320 = vmul.f32 %v316, 0.0625
  %v321 = vmul.f32 %v317, 0.0625
  %v322 = vfloor.f32 %v318
  %v323 = vfloor.f32 %v319
  %v324 = vfloor.f32 %v320
  %v325 = vfloor.f32 %v321
  %v326 = vadd.f32 %v304, 0.5
  %v327 = vmul.f32 %v326, 0.0625
  %v328 = vfloor.f32 %v327
  %vm329 = vcmp.eq.f32.partialorder %v322, %v328
  %vm330 = vcmp.eq.f32.partialorder %v323, %v328
  %vm331 = vcmp.eq.f32.partialorder %v324, %v328
  %vm332 = vcmp.eq.f32.partialorder %v325, %v328
  %v333 = vsel %vm329, %v291, 1e+30
  %v334 = vsel %vm330, %v294, 1e+30
  %v335 = vsel %vm331, %v297, 1e+30
  %v336 = vsel %vm332, %v300, 1e+30
  %v337 = vld [vmem:[%s4] sm:$0xf]
  %v338 = vsel %vm108, %v333, inf
  %339 = vmin.xlane.f32.xlu0 %v338
  %v340 = vpop.xlane.xlu0 %339
  %v341 = vsel %vm108, %v334, inf
  %342 = vmin.xlane.f32.xlu0 %v341
  %v343 = vpop.xlane.xlu0 %342
  %v344 = vsel %vm108, %v335, inf
  %345 = vmin.xlane.f32.xlu0 %v344
  %v346 = vpop.xlane.xlu0 %345
  %v347 = vsel %vm108, %v336, inf
  %348 = vmin.xlane.f32.xlu0 %v347
  %v349 = vpop.xlane.xlu0 %348
  %vm350 = vcmp.le.f32.partialorder %v333, %v340
  %vm351 = vcmp.le.f32.partialorder %v334, %v343
  %vm352 = vcmp.le.f32.partialorder %v335, %v346
  %vm353 = vcmp.le.f32.partialorder %v336, %v349
  %v354 = vsel %vm350, %v304, 32.0
  %v355 = vsel %vm351, %v304, 32.0
  %v356 = vsel %vm352, %v304, 32.0
  %v357 = vsel %vm353, %v304, 32.0
  %v358 = vsel %vm108, %v354, inf
  %359 = vmin.xlane.f32.xlu0 %v358
  %v360 = vpop.xlane.xlu0 %359
  %v361 = vsel %vm108, %v355, inf
  %362 = vmin.xlane.f32.xlu0 %v361
  %v363 = vpop.xlane.xlu0 %362
  %v364 = vsel %vm108, %v356, inf
  %365 = vmin.xlane.f32.xlu0 %v364
  %v366 = vpop.xlane.xlu0 %365
  %v367 = vsel %vm108, %v357, inf
  %368 = vmin.xlane.f32.xlu0 %v367
  %v369 = vpop.xlane.xlu0 %368
  %vm370 = vcmp.eq.f32.partialorder %v304, %v360
  %vm371 = vcmp.eq.f32.partialorder %v304, %v363
  %vm372 = vcmp.eq.f32.partialorder %v304, %v366
  %vm373 = vcmp.eq.f32.partialorder %v304, %v369
  %v374 = vsel %vm370, 1, 0
  %v375 = vsel %vm371, 1, 0
  %v376 = vsel %vm372, 1, 0
  %v377 = vsel %vm373, 1, 0
  %v378 = vcvt.s32.f32 %v374
  %v379 = vcvt.s32.f32 %v375
  %v380 = vcvt.s32.f32 %v376
  %v381 = vcvt.s32.f32 %v377
  %v383 = vsel %vm108, %v378, 0
  %v386 = vsel %vm108, %v379, 0
  %v389 = vsel %vm108, %v380, 0
  %v392 = vsel %vm108, %v381, 0
  %394 = vmatpush.msra.mxu0 0.0
  %395 = vmatpush.msra.mxu0 0.0
  %396 = vmatpush.msra.mxu0 0.0
  %397 = vmatpush.msra.mxu0 0.0
  %398 = vmatpush.msra.mxu0 0.0
  %399 = vmatpush.msra.mxu0 0.0
  %400 = vmatpush.msra.mxu0 0.0
  %401 = vmatpush.msra.mxu0 0.0
  %402 = vmatpush.msra.mxu0 0.0
  %403 = vmatpush.msra.mxu0 0.0
  %404 = vmatpush.msra.mxu0 0.0
  %405 = vmatpush.msra.mxu0 0.0
  %406 = vmatpush.msra.mxu0 %v190
  %407 = vmatpush.msra.mxu0 %v189
  %408 = vmatpush.msra.mxu0 %v188
  %409 = vmatpush.msra.mxu0 %v187
  %410 = vmatmul.f32.gmra.mxu0 %v383
  %v411 = vpop.f32.mrf.mxu0
  %v412 = vadd.f32 0.0, %v411
  %413 = vmatmul.f32.gmra.mxu0 %v386
  %v414 = vpop.f32.mrf.mxu0
  %v415 = vadd.f32 0.0, %v414
  %416 = vmatmul.f32.gmra.mxu0 %v389
  %v417 = vpop.f32.mrf.mxu0
  %v418 = vadd.f32 0.0, %v417
  %419 = vmatmul.f32.gmra.mxu0 %v392
  %v420 = vpop.f32.mrf.mxu0
  %v421 = vadd.f32 0.0, %v420
  %422 = vdwg.mxu0
  %v423 = vsub.f32 %v412, %v176
  %v424 = vsub.f32 %v415, %v178
  %v425 = vsub.f32 %v418, %v180
  %v426 = vsub.f32 %v421, %v182
  %v427 = vmul.f32 %v423, %v423
  %v428 = vmul.f32 %v424, %v424
  %v429 = vmul.f32 %v425, %v425
  %v430 = vmul.f32 %v426, %v426
  %435 = vrot.lane.b32.xlu0 %v427, 96
  %v436 = vpop.permute.xlu0 %435
  %437 = vrot.lane.b32.xlu0 %v428, 96
  %v438 = vpop.permute.xlu0 %437
  %439 = vrot.lane.b32.xlu0 %v429, 96
  %v440 = vpop.permute.xlu0 %439
  %441 = vrot.lane.b32.xlu0 %v430, 96
  %v442 = vpop.permute.xlu0 %441
  %v447 = vsel %vm195, %v436, 0.0
  %448 = vadd.xlane.f32.xlu0 %v447
  %v449 = vpop.xlane.xlu0 %448
  %v450 = vsel %vm195, %v438, 0.0
  %451 = vadd.xlane.f32.xlu0 %v450
  %v452 = vpop.xlane.xlu0 %451
  %v453 = vsel %vm195, %v440, 0.0
  %454 = vadd.xlane.f32.xlu0 %v453
  %v455 = vpop.xlane.xlu0 %454
  %v456 = vsel %vm195, %v442, 0.0
  %457 = vadd.xlane.f32.xlu0 %v456
  %v458 = vpop.xlane.xlu0 %457
  %v459 = vadd.f32 %v449, 1e-12
  %v460 = vadd.f32 %v452, 1e-12
  %v461 = vadd.f32 %v455, 1e-12
  %v462 = vadd.f32 %v458, 1e-12
  %v463 = vrsqrt.pop %v459
  %v464 = vmul.f32 %v463, %v459
  %v465 = vmul.f32 %v464, %v463
  %v466 = vmul.f32 0.5, %v465
  %v467 = vsub.f32 1.5, %v466
  %v468 = vmul.f32 %v463, %v467
  %vm469 = vweird.f32 %v459
  %vm470 = vweird.f32 %v463
  %vm471 = vmor %vm469, %vm470
  %v472 = vsel %vm471, %v463, %v468
  %v473 = vrsqrt.pop %v460
  %v474 = vmul.f32 %v473, %v460
  %v475 = vmul.f32 %v474, %v473
  %v476 = vmul.f32 0.5, %v475
  %v477 = vsub.f32 1.5, %v476
  %v478 = vmul.f32 %v473, %v477
  %vm479 = vweird.f32 %v460
  %vm480 = vweird.f32 %v473
  %vm481 = vmor %vm479, %vm480
  %v482 = vsel %vm481, %v473, %v478
  %v483 = vrsqrt.pop %v461
  %v484 = vmul.f32 %v483, %v461
  %v485 = vmul.f32 %v484, %v483
  %v486 = vmul.f32 0.5, %v485
  %v487 = vsub.f32 1.5, %v486
  %v488 = vmul.f32 %v483, %v487
  %vm489 = vweird.f32 %v461
  %vm490 = vweird.f32 %v483
  %vm491 = vmor %vm489, %vm490
  %v492 = vsel %vm491, %v483, %v488
  %v493 = vrsqrt.pop %v462
  %v494 = vmul.f32 %v493, %v462
  %v495 = vmul.f32 %v494, %v493
  %v496 = vmul.f32 0.5, %v495
  %v497 = vsub.f32 1.5, %v496
  %v498 = vmul.f32 %v493, %v497
  %vm499 = vweird.f32 %v462
  %vm500 = vweird.f32 %v493
  %vm501 = vmor %vm499, %vm500
  %v502 = vsel %vm501, %v493, %v498
  %v503 = vperm.slane %v337, 0
  %v504 = vmul.f32 %v449, %v503
  %v505 = vmul.f32 %v452, %v503
  %v506 = vmul.f32 %v455, %v503
  %v507 = vmul.f32 %v458, %v503
  %509 = vset.pattern.permute.xlu0 32
  %510 = vperm.xlu0 %509, %v423
  %v511 = vpop.permute.xlu0 %510
  %514 = vset.pattern.permute.xlu0 32
  %515 = vperm.xlu0 %514, %v424
  %v516 = vpop.permute.xlu0 %515
  %519 = vset.pattern.permute.xlu0 32
  %520 = vperm.xlu0 %519, %v425
  %v521 = vpop.permute.xlu0 %520
  %524 = vset.pattern.permute.xlu0 32
  %525 = vperm.xlu0 %524, %v426
  %v526 = vpop.permute.xlu0 %525
  %v528 = vperm.slane %v337, 1
  %v529 = vmul.f32 %v511, %v528
  %v530 = vmul.f32 %v516, %v528
  %v531 = vmul.f32 %v521, %v528
  %v532 = vmul.f32 %v526, %v528
  %v533 = vadd.f32 %v504, %v529
  %v534 = vadd.f32 %v505, %v530
  %v535 = vadd.f32 %v506, %v531
  %v536 = vadd.f32 %v507, %v532
  %537 = vset.pattern.permute.xlu0 33
  %538 = vperm.xlu0 %537, %v423
  %v539 = vpop.permute.xlu0 %538
  %541 = vset.pattern.permute.xlu0 33
  %542 = vperm.xlu0 %541, %v424
  %v543 = vpop.permute.xlu0 %542
  %545 = vset.pattern.permute.xlu0 33
  %546 = vperm.xlu0 %545, %v425
  %v547 = vpop.permute.xlu0 %546
  %549 = vset.pattern.permute.xlu0 33
  %550 = vperm.xlu0 %549, %v426
  %v551 = vpop.permute.xlu0 %550
  %v553 = vperm.slane %v337, 2
  %v554 = vmul.f32 %v539, %v553
  %v555 = vmul.f32 %v543, %v553
  %v556 = vmul.f32 %v547, %v553
  %v557 = vmul.f32 %v551, %v553
  %v558 = vadd.f32 %v533, %v554
  %v559 = vadd.f32 %v534, %v555
  %v560 = vadd.f32 %v535, %v556
  %v561 = vadd.f32 %v536, %v557
  %562 = vset.pattern.permute.xlu0 34
  %563 = vperm.xlu0 %562, %v423
  %v564 = vpop.permute.xlu0 %563
  %566 = vset.pattern.permute.xlu0 34
  %567 = vperm.xlu0 %566, %v424
  %v568 = vpop.permute.xlu0 %567
  %570 = vset.pattern.permute.xlu0 34
  %571 = vperm.xlu0 %570, %v425
  %v572 = vpop.permute.xlu0 %571
  %574 = vset.pattern.permute.xlu0 34
  %575 = vperm.xlu0 %574, %v426
  %v576 = vpop.permute.xlu0 %575
  %v578 = vperm.slane %v337, 3
  %v579 = vmul.f32 %v564, %v578
  %v580 = vmul.f32 %v568, %v578
  %v581 = vmul.f32 %v572, %v578
  %v582 = vmul.f32 %v576, %v578
  %v583 = vadd.f32 %v558, %v579
  %v584 = vadd.f32 %v559, %v580
  %v585 = vadd.f32 %v560, %v581
  %v586 = vadd.f32 %v561, %v582
  %v587 = vadd.f32 %v151, %v412
  %v588 = vadd.f32 %v152, %v415
  %v589 = vadd.f32 %v153, %v418
  %v590 = vadd.f32 %v154, %v421
  %v591 = vmul.f32 %v472, %v583
  %v592 = vmul.f32 %v482, %v584
  %v593 = vmul.f32 %v492, %v585
  %v594 = vmul.f32 %v502, %v586
  %v595 = vadd.f32 %v587, %v591
  %v596 = vadd.f32 %v588, %v592
  %v597 = vadd.f32 %v589, %v593
  %v598 = vadd.f32 %v590, %v594
  %v599 = vxor.u32 %v595, 2147483648
  %v600 = vxor.u32 %v596, 2147483648
  %v601 = vxor.u32 %v597, 2147483648
  %v602 = vxor.u32 %v598, 2147483648
  %v603 = vmul.f32 %v599, 1.442695
  %v604 = vpow.pop %v603
  %v605 = vmul.f32 %v600, 1.442695
  %v606 = vpow.pop %v605
  %v607 = vmul.f32 %v601, 1.442695
  %v608 = vpow.pop %v607
  %v609 = vmul.f32 %v602, 1.442695
  %v610 = vpow.pop %v609
  %v611 = vadd.f32 %v604, 1.0
  %v612 = vadd.f32 %v606, 1.0
  %v613 = vadd.f32 %v608, 1.0
  %v614 = vadd.f32 %v610, 1.0
  %v615 = vrcp.pop %v611
  %v616 = vmul.f32 %v611, %v615
  %v617 = vsub.f32 1.0, %v616
  %v618 = vmul.f32 %v615, %v617
  %v619 = vadd.f32 %v615, %v618
  %vm620 = vweird.f32 %v611
  %vm621 = vweird.f32 %v615
  %vm622 = vmor %vm620, %vm621
  %v623 = vsel %vm622, %v615, %v619
  %v624 = vand.u32 2147483647, %v611
  %vm625 = vcmp.eq.f32.partialorder %v624, 8.507059e+37
  %v626 = vand.u32 %v611, 2147483648
  %v627 = vor.u32 1.1754944e-38, %v626
  %v628 = vsel %vm625, %v627, %v623
  %v629 = vmul.f32 1.0, %v628
  %v630 = vrcp.pop %v612
  %v631 = vmul.f32 %v612, %v630
  %v632 = vsub.f32 1.0, %v631
  %v633 = vmul.f32 %v630, %v632
  %v634 = vadd.f32 %v630, %v633
  %vm635 = vweird.f32 %v612
  %vm636 = vweird.f32 %v630
  %vm637 = vmor %vm635, %vm636
  %v638 = vsel %vm637, %v630, %v634
  %v639 = vand.u32 2147483647, %v612
  %vm640 = vcmp.eq.f32.partialorder %v639, 8.507059e+37
  %v641 = vand.u32 %v612, 2147483648
  %v642 = vor.u32 1.1754944e-38, %v641
  %v643 = vsel %vm640, %v642, %v638
  %v644 = vmul.f32 1.0, %v643
  %v645 = vrcp.pop %v613
  %v646 = vmul.f32 %v613, %v645
  %v647 = vsub.f32 1.0, %v646
  %v648 = vmul.f32 %v645, %v647
  %v649 = vadd.f32 %v645, %v648
  %vm650 = vweird.f32 %v613
  %vm651 = vweird.f32 %v645
  %vm652 = vmor %vm650, %vm651
  %v653 = vsel %vm652, %v645, %v649
  %v654 = vand.u32 2147483647, %v613
  %vm655 = vcmp.eq.f32.partialorder %v654, 8.507059e+37
  %v656 = vand.u32 %v613, 2147483648
  %v657 = vor.u32 1.1754944e-38, %v656
  %v658 = vsel %vm655, %v657, %v653
  %v659 = vmul.f32 1.0, %v658
  %v660 = vrcp.pop %v614
  %v661 = vmul.f32 %v614, %v660
  %v662 = vsub.f32 1.0, %v661
  %v663 = vmul.f32 %v660, %v662
  %v664 = vadd.f32 %v660, %v663
  %vm665 = vweird.f32 %v614
  %vm666 = vweird.f32 %v660
  %vm667 = vmor %vm665, %vm666
  %v668 = vsel %vm667, %v660, %v664
  %v669 = vand.u32 2147483647, %v614
  %vm670 = vcmp.eq.f32.partialorder %v669, 8.507059e+37
  %v671 = vand.u32 %v614, 2147483648
  %v672 = vor.u32 1.1754944e-38, %v671
  %v673 = vsel %vm670, %v672, %v668
  %v674 = vmul.f32 1.0, %v673
  %v675 = vmul.f32 %v595, %v629
  %v676 = vmul.f32 %v596, %v644
  %v677 = vmul.f32 %v597, %v659
  %v678 = vmul.f32 %v598, %v674
  %v679 = vadd.f32 %v675, 0.0
  %v680 = vadd.f32 %v676, 0.0
  %v681 = vadd.f32 %v677, 0.0
  %v682 = vadd.f32 %v678, 0.0
  %v683 = vsel %vm370, 1e+30, %v333
  %v684 = vsel %vm371, 1e+30, %v334
  %v685 = vsel %vm372, 1e+30, %v335
  %v686 = vsel %vm373, 1e+30, %v336
  %v687 = vsel %vm108, %v683, inf
  %688 = vmin.xlane.f32.xlu0 %v687
  %v689 = vpop.xlane.xlu0 %688
  %v690 = vsel %vm108, %v684, inf
  %691 = vmin.xlane.f32.xlu0 %v690
  %v692 = vpop.xlane.xlu0 %691
  %v693 = vsel %vm108, %v685, inf
  %694 = vmin.xlane.f32.xlu0 %v693
  %v695 = vpop.xlane.xlu0 %694
  %v696 = vsel %vm108, %v686, inf
  %697 = vmin.xlane.f32.xlu0 %v696
  %v698 = vpop.xlane.xlu0 %697
  %vm699 = vcmp.le.f32.partialorder %v683, %v689
  %vm700 = vcmp.le.f32.partialorder %v684, %v692
  %vm701 = vcmp.le.f32.partialorder %v685, %v695
  %vm702 = vcmp.le.f32.partialorder %v686, %v698
  %v703 = vsel %vm699, %v304, 32.0
  %v704 = vsel %vm700, %v304, 32.0
  %v705 = vsel %vm701, %v304, 32.0
  %v706 = vsel %vm702, %v304, 32.0
  %v707 = vsel %vm108, %v703, inf
  %708 = vmin.xlane.f32.xlu0 %v707
  %v709 = vpop.xlane.xlu0 %708
  %v710 = vsel %vm108, %v704, inf
  %711 = vmin.xlane.f32.xlu0 %v710
  %v712 = vpop.xlane.xlu0 %711
  %v713 = vsel %vm108, %v705, inf
  %714 = vmin.xlane.f32.xlu0 %v713
  %v715 = vpop.xlane.xlu0 %714
  %v716 = vsel %vm108, %v706, inf
  %717 = vmin.xlane.f32.xlu0 %v716
  %v718 = vpop.xlane.xlu0 %717
  %vm719 = vcmp.eq.f32.partialorder %v304, %v709
  %vm720 = vcmp.eq.f32.partialorder %v304, %v712
  %vm721 = vcmp.eq.f32.partialorder %v304, %v715
  %vm722 = vcmp.eq.f32.partialorder %v304, %v718
  %v723 = vsel %vm719, 1, 0
  %v724 = vsel %vm720, 1, 0
  %v725 = vsel %vm721, 1, 0
  %v726 = vsel %vm722, 1, 0
  %v727 = vcvt.s32.f32 %v723
  %v728 = vcvt.s32.f32 %v724
  %v729 = vcvt.s32.f32 %v725
  %v730 = vcvt.s32.f32 %v726
  %v732 = vsel %vm108, %v727, 0
  %v735 = vsel %vm108, %v728, 0
  %v738 = vsel %vm108, %v729, 0
  %v741 = vsel %vm108, %v730, 0
  %743 = vmatpush.msra.mxu0 0.0
  %744 = vmatpush.msra.mxu0 0.0
  %745 = vmatpush.msra.mxu0 0.0
  %746 = vmatpush.msra.mxu0 0.0
  %747 = vmatpush.msra.mxu0 0.0
  %748 = vmatpush.msra.mxu0 0.0
  %749 = vmatpush.msra.mxu0 0.0
  %750 = vmatpush.msra.mxu0 0.0
  %751 = vmatpush.msra.mxu0 0.0
  %752 = vmatpush.msra.mxu0 0.0
  %753 = vmatpush.msra.mxu0 0.0
  %754 = vmatpush.msra.mxu0 0.0
  %755 = vmatpush.msra.mxu0 %v190
  %756 = vmatpush.msra.mxu0 %v189
  %757 = vmatpush.msra.mxu0 %v188
  %758 = vmatpush.msra.mxu0 %v187
  %759 = vmatmul.f32.gmra.mxu0 %v732
  %v760 = vpop.f32.mrf.mxu0
  %v761 = vadd.f32 0.0, %v760
  %762 = vmatmul.f32.gmra.mxu0 %v735
  %v763 = vpop.f32.mrf.mxu0
  %v764 = vadd.f32 0.0, %v763
  %765 = vmatmul.f32.gmra.mxu0 %v738
  %v766 = vpop.f32.mrf.mxu0
  %v767 = vadd.f32 0.0, %v766
  %768 = vmatmul.f32.gmra.mxu0 %v741
  %v769 = vpop.f32.mrf.mxu0
  %v770 = vadd.f32 0.0, %v769
  %771 = vdwg.mxu0
  %v772 = vsub.f32 %v761, %v176
  %v773 = vsub.f32 %v764, %v178
  %v774 = vsub.f32 %v767, %v180
  %v775 = vsub.f32 %v770, %v182
  %v776 = vmul.f32 %v772, %v772
  %v777 = vmul.f32 %v773, %v773
  %v778 = vmul.f32 %v774, %v774
  %v779 = vmul.f32 %v775, %v775
  %784 = vrot.lane.b32.xlu0 %v776, 96
  %v785 = vpop.permute.xlu0 %784
  %786 = vrot.lane.b32.xlu0 %v777, 96
  %v787 = vpop.permute.xlu0 %786
  %788 = vrot.lane.b32.xlu0 %v778, 96
  %v789 = vpop.permute.xlu0 %788
  %790 = vrot.lane.b32.xlu0 %v779, 96
  %v791 = vpop.permute.xlu0 %790
  %v796 = vsel %vm195, %v785, 0.0
  %797 = vadd.xlane.f32.xlu0 %v796
  %v798 = vpop.xlane.xlu0 %797
  %v799 = vsel %vm195, %v787, 0.0
  %800 = vadd.xlane.f32.xlu0 %v799
  %v801 = vpop.xlane.xlu0 %800
  %v802 = vsel %vm195, %v789, 0.0
  %803 = vadd.xlane.f32.xlu0 %v802
  %v804 = vpop.xlane.xlu0 %803
  %v805 = vsel %vm195, %v791, 0.0
  %806 = vadd.xlane.f32.xlu0 %v805
  %v807 = vpop.xlane.xlu0 %806
  %v808 = vadd.f32 %v798, 1e-12
  %v809 = vadd.f32 %v801, 1e-12
  %v810 = vadd.f32 %v804, 1e-12
  %v811 = vadd.f32 %v807, 1e-12
  %v812 = vrsqrt.pop %v808
  %v813 = vmul.f32 %v812, %v808
  %v814 = vmul.f32 %v813, %v812
  %v815 = vmul.f32 0.5, %v814
  %v816 = vsub.f32 1.5, %v815
  %v817 = vmul.f32 %v812, %v816
  %vm818 = vweird.f32 %v808
  %vm819 = vweird.f32 %v812
  %vm820 = vmor %vm818, %vm819
  %v821 = vsel %vm820, %v812, %v817
  %v822 = vrsqrt.pop %v809
  %v823 = vmul.f32 %v822, %v809
  %v824 = vmul.f32 %v823, %v822
  %v825 = vmul.f32 0.5, %v824
  %v826 = vsub.f32 1.5, %v825
  %v827 = vmul.f32 %v822, %v826
  %vm828 = vweird.f32 %v809
  %vm829 = vweird.f32 %v822
  %vm830 = vmor %vm828, %vm829
  %v831 = vsel %vm830, %v822, %v827
  %v832 = vrsqrt.pop %v810
  %v833 = vmul.f32 %v832, %v810
  %v834 = vmul.f32 %v833, %v832
  %v835 = vmul.f32 0.5, %v834
  %v836 = vsub.f32 1.5, %v835
  %v837 = vmul.f32 %v832, %v836
  %vm838 = vweird.f32 %v810
  %vm839 = vweird.f32 %v832
  %vm840 = vmor %vm838, %vm839
  %v841 = vsel %vm840, %v832, %v837
  %v842 = vrsqrt.pop %v811
  %v843 = vmul.f32 %v842, %v811
  %v844 = vmul.f32 %v843, %v842
  %v845 = vmul.f32 0.5, %v844
  %v846 = vsub.f32 1.5, %v845
  %v847 = vmul.f32 %v842, %v846
  %vm848 = vweird.f32 %v811
  %vm849 = vweird.f32 %v842
  %vm850 = vmor %vm848, %vm849
  %v851 = vsel %vm850, %v842, %v847
  %v852 = vmul.f32 %v798, %v503
  %v853 = vmul.f32 %v801, %v503
  %v854 = vmul.f32 %v804, %v503
  %v855 = vmul.f32 %v807, %v503
  %857 = vset.pattern.permute.xlu0 32
  %858 = vperm.xlu0 %857, %v772
  %v859 = vpop.permute.xlu0 %858
  %862 = vset.pattern.permute.xlu0 32
  %863 = vperm.xlu0 %862, %v773
  %v864 = vpop.permute.xlu0 %863
  %867 = vset.pattern.permute.xlu0 32
  %868 = vperm.xlu0 %867, %v774
  %v869 = vpop.permute.xlu0 %868
  %872 = vset.pattern.permute.xlu0 32
  %873 = vperm.xlu0 %872, %v775
  %v874 = vpop.permute.xlu0 %873
  %v876 = vmul.f32 %v859, %v528
  %v877 = vmul.f32 %v864, %v528
  %v878 = vmul.f32 %v869, %v528
  %v879 = vmul.f32 %v874, %v528
  %v880 = vadd.f32 %v852, %v876
  %v881 = vadd.f32 %v853, %v877
  %v882 = vadd.f32 %v854, %v878
  %v883 = vadd.f32 %v855, %v879
  %884 = vset.pattern.permute.xlu0 33
  %885 = vperm.xlu0 %884, %v772
  %v886 = vpop.permute.xlu0 %885
  %888 = vset.pattern.permute.xlu0 33
  %889 = vperm.xlu0 %888, %v773
  %v890 = vpop.permute.xlu0 %889
  %892 = vset.pattern.permute.xlu0 33
  %893 = vperm.xlu0 %892, %v774
  %v894 = vpop.permute.xlu0 %893
  %896 = vset.pattern.permute.xlu0 33
  %897 = vperm.xlu0 %896, %v775
  %v898 = vpop.permute.xlu0 %897
  %v900 = vmul.f32 %v886, %v553
  %v901 = vmul.f32 %v890, %v553
  %v902 = vmul.f32 %v894, %v553
  %v903 = vmul.f32 %v898, %v553
  %v904 = vadd.f32 %v880, %v900
  %v905 = vadd.f32 %v881, %v901
  %v906 = vadd.f32 %v882, %v902
  %v907 = vadd.f32 %v883, %v903
  %908 = vset.pattern.permute.xlu0 34
  %909 = vperm.xlu0 %908, %v772
  %v910 = vpop.permute.xlu0 %909
  %912 = vset.pattern.permute.xlu0 34
  %913 = vperm.xlu0 %912, %v773
  %v914 = vpop.permute.xlu0 %913
  %916 = vset.pattern.permute.xlu0 34
  %917 = vperm.xlu0 %916, %v774
  %v918 = vpop.permute.xlu0 %917
  %920 = vset.pattern.permute.xlu0 34
  %921 = vperm.xlu0 %920, %v775
  %v922 = vpop.permute.xlu0 %921
  %v924 = vmul.f32 %v910, %v578
  %v925 = vmul.f32 %v914, %v578
  %v926 = vmul.f32 %v918, %v578
  %v927 = vmul.f32 %v922, %v578
  %v928 = vadd.f32 %v904, %v924
  %v929 = vadd.f32 %v905, %v925
  %v930 = vadd.f32 %v906, %v926
  %v931 = vadd.f32 %v907, %v927
  %v932 = vadd.f32 %v151, %v761
  %v933 = vadd.f32 %v152, %v764
  %v934 = vadd.f32 %v153, %v767
  %v935 = vadd.f32 %v154, %v770
  %v936 = vmul.f32 %v821, %v928
  %v937 = vmul.f32 %v831, %v929
  %v938 = vmul.f32 %v841, %v930
  %v939 = vmul.f32 %v851, %v931
  %v940 = vadd.f32 %v932, %v936
  %v941 = vadd.f32 %v933, %v937
  %v942 = vadd.f32 %v934, %v938
  %v943 = vadd.f32 %v935, %v939
  %v944 = vxor.u32 %v940, 2147483648
  %v945 = vxor.u32 %v941, 2147483648
  %v946 = vxor.u32 %v942, 2147483648
  %v947 = vxor.u32 %v943, 2147483648
  %v948 = vmul.f32 %v944, 1.442695
  %v949 = vpow.pop %v948
  %v950 = vmul.f32 %v945, 1.442695
  %v951 = vpow.pop %v950
  %v952 = vmul.f32 %v946, 1.442695
  %v953 = vpow.pop %v952
  %v954 = vmul.f32 %v947, 1.442695
  %v955 = vpow.pop %v954
  %v956 = vadd.f32 %v949, 1.0
  %v957 = vadd.f32 %v951, 1.0
  %v958 = vadd.f32 %v953, 1.0
  %v959 = vadd.f32 %v955, 1.0
  %v960 = vrcp.pop %v956
  %v961 = vmul.f32 %v956, %v960
  %v962 = vsub.f32 1.0, %v961
  %v963 = vmul.f32 %v960, %v962
  %v964 = vadd.f32 %v960, %v963
  %vm965 = vweird.f32 %v956
  %vm966 = vweird.f32 %v960
  %vm967 = vmor %vm965, %vm966
  %v968 = vsel %vm967, %v960, %v964
  %v969 = vand.u32 2147483647, %v956
  %vm970 = vcmp.eq.f32.partialorder %v969, 8.507059e+37
  %v971 = vand.u32 %v956, 2147483648
  %v972 = vor.u32 1.1754944e-38, %v971
  %v973 = vsel %vm970, %v972, %v968
  %v974 = vmul.f32 1.0, %v973
  %v975 = vrcp.pop %v957
  %v976 = vmul.f32 %v957, %v975
  %v977 = vsub.f32 1.0, %v976
  %v978 = vmul.f32 %v975, %v977
  %v979 = vadd.f32 %v975, %v978
  %vm980 = vweird.f32 %v957
  %vm981 = vweird.f32 %v975
  %vm982 = vmor %vm980, %vm981
  %v983 = vsel %vm982, %v975, %v979
  %v984 = vand.u32 2147483647, %v957
  %vm985 = vcmp.eq.f32.partialorder %v984, 8.507059e+37
  %v986 = vand.u32 %v957, 2147483648
  %v987 = vor.u32 1.1754944e-38, %v986
  %v988 = vsel %vm985, %v987, %v983
  %v989 = vmul.f32 1.0, %v988
  %v990 = vrcp.pop %v958
  %v991 = vmul.f32 %v958, %v990
  %v992 = vsub.f32 1.0, %v991
  %v993 = vmul.f32 %v990, %v992
  %v994 = vadd.f32 %v990, %v993
  %vm995 = vweird.f32 %v958
  %vm996 = vweird.f32 %v990
  %vm997 = vmor %vm995, %vm996
  %v998 = vsel %vm997, %v990, %v994
  %v999 = vand.u32 2147483647, %v958
  %vm1000 = vcmp.eq.f32.partialorder %v999, 8.507059e+37
  %v1001 = vand.u32 %v958, 2147483648
  %v1002 = vor.u32 1.1754944e-38, %v1001
  %v1003 = vsel %vm1000, %v1002, %v998
  %v1004 = vmul.f32 1.0, %v1003
  %v1005 = vrcp.pop %v959
  %v1006 = vmul.f32 %v959, %v1005
  %v1007 = vsub.f32 1.0, %v1006
  %v1008 = vmul.f32 %v1005, %v1007
  %v1009 = vadd.f32 %v1005, %v1008
  %vm1010 = vweird.f32 %v959
  %vm1011 = vweird.f32 %v1005
  %vm1012 = vmor %vm1010, %vm1011
  %v1013 = vsel %vm1012, %v1005, %v1009
  %v1014 = vand.u32 2147483647, %v959
  %vm1015 = vcmp.eq.f32.partialorder %v1014, 8.507059e+37
  %v1016 = vand.u32 %v959, 2147483648
  %v1017 = vor.u32 1.1754944e-38, %v1016
  %v1018 = vsel %vm1015, %v1017, %v1013
  %v1019 = vmul.f32 1.0, %v1018
  %v1020 = vmul.f32 %v940, %v974
  %v1021 = vmul.f32 %v941, %v989
  %v1022 = vmul.f32 %v942, %v1004
  %v1023 = vmul.f32 %v943, %v1019
  %v1024 = vadd.f32 %v679, %v1020
  %v1025 = vadd.f32 %v680, %v1021
  %v1026 = vadd.f32 %v681, %v1022
  %v1027 = vadd.f32 %v682, %v1023
  %v1028 = vsel %vm719, 1e+30, %v683
  %v1029 = vsel %vm720, 1e+30, %v684
  %v1030 = vsel %vm721, 1e+30, %v685
  %v1031 = vsel %vm722, 1e+30, %v686
  %v1032 = vsel %vm108, %v1028, inf
  %1033 = vmin.xlane.f32.xlu0 %v1032
  %v1034 = vpop.xlane.xlu0 %1033
  %v1035 = vsel %vm108, %v1029, inf
  %1036 = vmin.xlane.f32.xlu0 %v1035
  %v1037 = vpop.xlane.xlu0 %1036
  %v1038 = vsel %vm108, %v1030, inf
  %1039 = vmin.xlane.f32.xlu0 %v1038
  %v1040 = vpop.xlane.xlu0 %1039
  %v1041 = vsel %vm108, %v1031, inf
  %1042 = vmin.xlane.f32.xlu0 %v1041
  %v1043 = vpop.xlane.xlu0 %1042
  %vm1044 = vcmp.le.f32.partialorder %v1028, %v1034
  %vm1045 = vcmp.le.f32.partialorder %v1029, %v1037
  %vm1046 = vcmp.le.f32.partialorder %v1030, %v1040
  %vm1047 = vcmp.le.f32.partialorder %v1031, %v1043
  %v1048 = vsel %vm1044, %v304, 32.0
  %v1049 = vsel %vm1045, %v304, 32.0
  %v1050 = vsel %vm1046, %v304, 32.0
  %v1051 = vsel %vm1047, %v304, 32.0
  %v1052 = vsel %vm108, %v1048, inf
  %1053 = vmin.xlane.f32.xlu0 %v1052
  %v1054 = vpop.xlane.xlu0 %1053
  %v1055 = vsel %vm108, %v1049, inf
  %1056 = vmin.xlane.f32.xlu0 %v1055
  %v1057 = vpop.xlane.xlu0 %1056
  %v1058 = vsel %vm108, %v1050, inf
  %1059 = vmin.xlane.f32.xlu0 %v1058
  %v1060 = vpop.xlane.xlu0 %1059
  %v1061 = vsel %vm108, %v1051, inf
  %1062 = vmin.xlane.f32.xlu0 %v1061
  %v1063 = vpop.xlane.xlu0 %1062
  %vm1064 = vcmp.eq.f32.partialorder %v304, %v1054
  %vm1065 = vcmp.eq.f32.partialorder %v304, %v1057
  %vm1066 = vcmp.eq.f32.partialorder %v304, %v1060
  %vm1067 = vcmp.eq.f32.partialorder %v304, %v1063
  %v1068 = vsel %vm1064, 1, 0
  %v1069 = vsel %vm1065, 1, 0
  %v1070 = vsel %vm1066, 1, 0
  %v1071 = vsel %vm1067, 1, 0
  %v1072 = vcvt.s32.f32 %v1068
  %v1073 = vcvt.s32.f32 %v1069
  %v1074 = vcvt.s32.f32 %v1070
  %v1075 = vcvt.s32.f32 %v1071
  %v1077 = vsel %vm108, %v1072, 0
  %v1080 = vsel %vm108, %v1073, 0
  %v1083 = vsel %vm108, %v1074, 0
  %v1086 = vsel %vm108, %v1075, 0
  %1088 = vmatpush.msra.mxu0 0.0
  %1089 = vmatpush.msra.mxu0 0.0
  %1090 = vmatpush.msra.mxu0 0.0
  %1091 = vmatpush.msra.mxu0 0.0
  %1092 = vmatpush.msra.mxu0 0.0
  %1093 = vmatpush.msra.mxu0 0.0
  %1094 = vmatpush.msra.mxu0 0.0
  %1095 = vmatpush.msra.mxu0 0.0
  %1096 = vmatpush.msra.mxu0 0.0
  %1097 = vmatpush.msra.mxu0 0.0
  %1098 = vmatpush.msra.mxu0 0.0
  %1099 = vmatpush.msra.mxu0 0.0
  %1100 = vmatpush.msra.mxu0 %v190
  %1101 = vmatpush.msra.mxu0 %v189
  %1102 = vmatpush.msra.mxu0 %v188
  %1103 = vmatpush.msra.mxu0 %v187
  %1104 = vmatmul.f32.gmra.mxu0 %v1077
  %v1105 = vpop.f32.mrf.mxu0
  %v1106 = vadd.f32 0.0, %v1105
  %1107 = vmatmul.f32.gmra.mxu0 %v1080
  %v1108 = vpop.f32.mrf.mxu0
  %v1109 = vadd.f32 0.0, %v1108
  %1110 = vmatmul.f32.gmra.mxu0 %v1083
  %v1111 = vpop.f32.mrf.mxu0
  %v1112 = vadd.f32 0.0, %v1111
  %1113 = vmatmul.f32.gmra.mxu0 %v1086
  %v1114 = vpop.f32.mrf.mxu0
  %v1115 = vadd.f32 0.0, %v1114
  %1116 = vdwg.mxu0
  %v1117 = vsub.f32 %v1106, %v176
  %v1118 = vsub.f32 %v1109, %v178
  %v1119 = vsub.f32 %v1112, %v180
  %v1120 = vsub.f32 %v1115, %v182
  %v1121 = vmul.f32 %v1117, %v1117
  %v1122 = vmul.f32 %v1118, %v1118
  %v1123 = vmul.f32 %v1119, %v1119
  %v1124 = vmul.f32 %v1120, %v1120
  %1129 = vrot.lane.b32.xlu0 %v1121, 96
  %v1130 = vpop.permute.xlu0 %1129
  %1131 = vrot.lane.b32.xlu0 %v1122, 96
  %v1132 = vpop.permute.xlu0 %1131
  %1133 = vrot.lane.b32.xlu0 %v1123, 96
  %v1134 = vpop.permute.xlu0 %1133
  %1135 = vrot.lane.b32.xlu0 %v1124, 96
  %v1136 = vpop.permute.xlu0 %1135
  %v1141 = vsel %vm195, %v1130, 0.0
  %1142 = vadd.xlane.f32.xlu0 %v1141
  %v1143 = vpop.xlane.xlu0 %1142
  %v1144 = vsel %vm195, %v1132, 0.0
  %1145 = vadd.xlane.f32.xlu0 %v1144
  %v1146 = vpop.xlane.xlu0 %1145
  %v1147 = vsel %vm195, %v1134, 0.0
  %1148 = vadd.xlane.f32.xlu0 %v1147
  %v1149 = vpop.xlane.xlu0 %1148
  %v1150 = vsel %vm195, %v1136, 0.0
  %1151 = vadd.xlane.f32.xlu0 %v1150
  %v1152 = vpop.xlane.xlu0 %1151
  %v1153 = vadd.f32 %v1143, 1e-12
  %v1154 = vadd.f32 %v1146, 1e-12
  %v1155 = vadd.f32 %v1149, 1e-12
  %v1156 = vadd.f32 %v1152, 1e-12
  %v1157 = vrsqrt.pop %v1153
  %v1158 = vmul.f32 %v1157, %v1153
  %v1159 = vmul.f32 %v1158, %v1157
  %v1160 = vmul.f32 0.5, %v1159
  %v1161 = vsub.f32 1.5, %v1160
  %v1162 = vmul.f32 %v1157, %v1161
  %vm1163 = vweird.f32 %v1153
  %vm1164 = vweird.f32 %v1157
  %vm1165 = vmor %vm1163, %vm1164
  %v1166 = vsel %vm1165, %v1157, %v1162
  %v1167 = vrsqrt.pop %v1154
  %v1168 = vmul.f32 %v1167, %v1154
  %v1169 = vmul.f32 %v1168, %v1167
  %v1170 = vmul.f32 0.5, %v1169
  %v1171 = vsub.f32 1.5, %v1170
  %v1172 = vmul.f32 %v1167, %v1171
  %vm1173 = vweird.f32 %v1154
  %vm1174 = vweird.f32 %v1167
  %vm1175 = vmor %vm1173, %vm1174
  %v1176 = vsel %vm1175, %v1167, %v1172
  %v1177 = vrsqrt.pop %v1155
  %v1178 = vmul.f32 %v1177, %v1155
  %v1179 = vmul.f32 %v1178, %v1177
  %v1180 = vmul.f32 0.5, %v1179
  %v1181 = vsub.f32 1.5, %v1180
  %v1182 = vmul.f32 %v1177, %v1181
  %vm1183 = vweird.f32 %v1155
  %vm1184 = vweird.f32 %v1177
  %vm1185 = vmor %vm1183, %vm1184
  %v1186 = vsel %vm1185, %v1177, %v1182
  %v1187 = vrsqrt.pop %v1156
  %v1188 = vmul.f32 %v1187, %v1156
  %v1189 = vmul.f32 %v1188, %v1187
  %v1190 = vmul.f32 0.5, %v1189
  %v1191 = vsub.f32 1.5, %v1190
  %v1192 = vmul.f32 %v1187, %v1191
  %vm1193 = vweird.f32 %v1156
  %vm1194 = vweird.f32 %v1187
  %vm1195 = vmor %vm1193, %vm1194
  %v1196 = vsel %vm1195, %v1187, %v1192
  %v1197 = vmul.f32 %v1143, %v503
  %v1198 = vmul.f32 %v1146, %v503
  %v1199 = vmul.f32 %v1149, %v503
  %v1200 = vmul.f32 %v1152, %v503
  %1202 = vset.pattern.permute.xlu0 32
  %1203 = vperm.xlu0 %1202, %v1117
  %v1204 = vpop.permute.xlu0 %1203
  %1207 = vset.pattern.permute.xlu0 32
  %1208 = vperm.xlu0 %1207, %v1118
  %v1209 = vpop.permute.xlu0 %1208
  %1212 = vset.pattern.permute.xlu0 32
  %1213 = vperm.xlu0 %1212, %v1119
  %v1214 = vpop.permute.xlu0 %1213
  %1217 = vset.pattern.permute.xlu0 32
  %1218 = vperm.xlu0 %1217, %v1120
  %v1219 = vpop.permute.xlu0 %1218
  %v1221 = vmul.f32 %v1204, %v528
  %v1222 = vmul.f32 %v1209, %v528
  %v1223 = vmul.f32 %v1214, %v528
  %v1224 = vmul.f32 %v1219, %v528
  %v1225 = vadd.f32 %v1197, %v1221
  %v1226 = vadd.f32 %v1198, %v1222
  %v1227 = vadd.f32 %v1199, %v1223
  %v1228 = vadd.f32 %v1200, %v1224
  %1229 = vset.pattern.permute.xlu0 33
  %1230 = vperm.xlu0 %1229, %v1117
  %v1231 = vpop.permute.xlu0 %1230
  %1233 = vset.pattern.permute.xlu0 33
  %1234 = vperm.xlu0 %1233, %v1118
  %v1235 = vpop.permute.xlu0 %1234
  %1237 = vset.pattern.permute.xlu0 33
  %1238 = vperm.xlu0 %1237, %v1119
  %v1239 = vpop.permute.xlu0 %1238
  %1241 = vset.pattern.permute.xlu0 33
  %1242 = vperm.xlu0 %1241, %v1120
  %v1243 = vpop.permute.xlu0 %1242
  %v1245 = vmul.f32 %v1231, %v553
  %v1246 = vmul.f32 %v1235, %v553
  %v1247 = vmul.f32 %v1239, %v553
  %v1248 = vmul.f32 %v1243, %v553
  %v1249 = vadd.f32 %v1225, %v1245
  %v1250 = vadd.f32 %v1226, %v1246
  %v1251 = vadd.f32 %v1227, %v1247
  %v1252 = vadd.f32 %v1228, %v1248
  %1253 = vset.pattern.permute.xlu0 34
  %1254 = vperm.xlu0 %1253, %v1117
  %v1255 = vpop.permute.xlu0 %1254
  %1257 = vset.pattern.permute.xlu0 34
  %1258 = vperm.xlu0 %1257, %v1118
  %v1259 = vpop.permute.xlu0 %1258
  %1261 = vset.pattern.permute.xlu0 34
  %1262 = vperm.xlu0 %1261, %v1119
  %v1263 = vpop.permute.xlu0 %1262
  %1265 = vset.pattern.permute.xlu0 34
  %1266 = vperm.xlu0 %1265, %v1120
  %v1267 = vpop.permute.xlu0 %1266
  %v1269 = vmul.f32 %v1255, %v578
  %v1270 = vmul.f32 %v1259, %v578
  %v1271 = vmul.f32 %v1263, %v578
  %v1272 = vmul.f32 %v1267, %v578
  %v1273 = vadd.f32 %v1249, %v1269
  %v1274 = vadd.f32 %v1250, %v1270
  %v1275 = vadd.f32 %v1251, %v1271
  %v1276 = vadd.f32 %v1252, %v1272
  %v1277 = vadd.f32 %v151, %v1106
  %v1278 = vadd.f32 %v152, %v1109
  %v1279 = vadd.f32 %v153, %v1112
  %v1280 = vadd.f32 %v154, %v1115
  %v1281 = vmul.f32 %v1166, %v1273
  %v1282 = vmul.f32 %v1176, %v1274
  %v1283 = vmul.f32 %v1186, %v1275
  %v1284 = vmul.f32 %v1196, %v1276
  %v1285 = vadd.f32 %v1277, %v1281
  %v1286 = vadd.f32 %v1278, %v1282
  %v1287 = vadd.f32 %v1279, %v1283
  %v1288 = vadd.f32 %v1280, %v1284
  %v1289 = vxor.u32 %v1285, 2147483648
  %v1290 = vxor.u32 %v1286, 2147483648
  %v1291 = vxor.u32 %v1287, 2147483648
  %v1292 = vxor.u32 %v1288, 2147483648
  %v1293 = vmul.f32 %v1289, 1.442695
  %v1294 = vpow.pop %v1293
  %v1295 = vmul.f32 %v1290, 1.442695
  %v1296 = vpow.pop %v1295
  %v1297 = vmul.f32 %v1291, 1.442695
  %v1298 = vpow.pop %v1297
  %v1299 = vmul.f32 %v1292, 1.442695
  %v1300 = vpow.pop %v1299
  %v1301 = vadd.f32 %v1294, 1.0
  %v1302 = vadd.f32 %v1296, 1.0
  %v1303 = vadd.f32 %v1298, 1.0
  %v1304 = vadd.f32 %v1300, 1.0
  %v1305 = vrcp.pop %v1301
  %v1306 = vmul.f32 %v1301, %v1305
  %v1307 = vsub.f32 1.0, %v1306
  %v1308 = vmul.f32 %v1305, %v1307
  %v1309 = vadd.f32 %v1305, %v1308
  %vm1310 = vweird.f32 %v1301
  %vm1311 = vweird.f32 %v1305
  %vm1312 = vmor %vm1310, %vm1311
  %v1313 = vsel %vm1312, %v1305, %v1309
  %v1314 = vand.u32 2147483647, %v1301
  %vm1315 = vcmp.eq.f32.partialorder %v1314, 8.507059e+37
  %v1316 = vand.u32 %v1301, 2147483648
  %v1317 = vor.u32 1.1754944e-38, %v1316
  %v1318 = vsel %vm1315, %v1317, %v1313
  %v1319 = vmul.f32 1.0, %v1318
  %v1320 = vrcp.pop %v1302
  %v1321 = vmul.f32 %v1302, %v1320
  %v1322 = vsub.f32 1.0, %v1321
  %v1323 = vmul.f32 %v1320, %v1322
  %v1324 = vadd.f32 %v1320, %v1323
  %vm1325 = vweird.f32 %v1302
  %vm1326 = vweird.f32 %v1320
  %vm1327 = vmor %vm1325, %vm1326
  %v1328 = vsel %vm1327, %v1320, %v1324
  %v1329 = vand.u32 2147483647, %v1302
  %vm1330 = vcmp.eq.f32.partialorder %v1329, 8.507059e+37
  %v1331 = vand.u32 %v1302, 2147483648
  %v1332 = vor.u32 1.1754944e-38, %v1331
  %v1333 = vsel %vm1330, %v1332, %v1328
  %v1334 = vmul.f32 1.0, %v1333
  %v1335 = vrcp.pop %v1303
  %v1336 = vmul.f32 %v1303, %v1335
  %v1337 = vsub.f32 1.0, %v1336
  %v1338 = vmul.f32 %v1335, %v1337
  %v1339 = vadd.f32 %v1335, %v1338
  %vm1340 = vweird.f32 %v1303
  %vm1341 = vweird.f32 %v1335
  %vm1342 = vmor %vm1340, %vm1341
  %v1343 = vsel %vm1342, %v1335, %v1339
  %v1344 = vand.u32 2147483647, %v1303
  %vm1345 = vcmp.eq.f32.partialorder %v1344, 8.507059e+37
  %v1346 = vand.u32 %v1303, 2147483648
  %v1347 = vor.u32 1.1754944e-38, %v1346
  %v1348 = vsel %vm1345, %v1347, %v1343
  %v1349 = vmul.f32 1.0, %v1348
  %v1350 = vrcp.pop %v1304
  %v1351 = vmul.f32 %v1304, %v1350
  %v1352 = vsub.f32 1.0, %v1351
  %v1353 = vmul.f32 %v1350, %v1352
  %v1354 = vadd.f32 %v1350, %v1353
  %vm1355 = vweird.f32 %v1304
  %vm1356 = vweird.f32 %v1350
  %vm1357 = vmor %vm1355, %vm1356
  %v1358 = vsel %vm1357, %v1350, %v1354
  %v1359 = vand.u32 2147483647, %v1304
  %vm1360 = vcmp.eq.f32.partialorder %v1359, 8.507059e+37
  %v1361 = vand.u32 %v1304, 2147483648
  %v1362 = vor.u32 1.1754944e-38, %v1361
  %v1363 = vsel %vm1360, %v1362, %v1358
  %v1364 = vmul.f32 1.0, %v1363
  %v1365 = vmul.f32 %v1285, %v1319
  %v1366 = vmul.f32 %v1286, %v1334
  %v1367 = vmul.f32 %v1287, %v1349
  %v1368 = vmul.f32 %v1288, %v1364
  %v1369 = vadd.f32 %v1024, %v1365
  %v1370 = vadd.f32 %v1025, %v1366
  %v1371 = vadd.f32 %v1026, %v1367
  %v1372 = vadd.f32 %v1027, %v1368
  %v1373 = vsel %vm1064, 1e+30, %v1028
  %v1374 = vsel %vm1065, 1e+30, %v1029
  %v1375 = vsel %vm1066, 1e+30, %v1030
  %v1376 = vsel %vm1067, 1e+30, %v1031
  %v1377 = vsel %vm108, %v1373, inf
  %1378 = vmin.xlane.f32.xlu0 %v1377
  %v1379 = vpop.xlane.xlu0 %1378
  %v1380 = vsel %vm108, %v1374, inf
  %1381 = vmin.xlane.f32.xlu0 %v1380
  %v1382 = vpop.xlane.xlu0 %1381
  %v1383 = vsel %vm108, %v1375, inf
  %1384 = vmin.xlane.f32.xlu0 %v1383
  %v1385 = vpop.xlane.xlu0 %1384
  %v1386 = vsel %vm108, %v1376, inf
  %1387 = vmin.xlane.f32.xlu0 %v1386
  %v1388 = vpop.xlane.xlu0 %1387
  %vm1389 = vcmp.le.f32.partialorder %v1373, %v1379
  %vm1390 = vcmp.le.f32.partialorder %v1374, %v1382
  %vm1391 = vcmp.le.f32.partialorder %v1375, %v1385
  %vm1392 = vcmp.le.f32.partialorder %v1376, %v1388
  %v1393 = vsel %vm1389, %v304, 32.0
  %v1394 = vsel %vm1390, %v304, 32.0
  %v1395 = vsel %vm1391, %v304, 32.0
  %v1396 = vsel %vm1392, %v304, 32.0
  %v1397 = vsel %vm108, %v1393, inf
  %1398 = vmin.xlane.f32.xlu0 %v1397
  %v1399 = vpop.xlane.xlu0 %1398
  %v1400 = vsel %vm108, %v1394, inf
  %1401 = vmin.xlane.f32.xlu0 %v1400
  %v1402 = vpop.xlane.xlu0 %1401
  %v1403 = vsel %vm108, %v1395, inf
  %1404 = vmin.xlane.f32.xlu0 %v1403
  %v1405 = vpop.xlane.xlu0 %1404
  %v1406 = vsel %vm108, %v1396, inf
  %1407 = vmin.xlane.f32.xlu0 %v1406
  %v1408 = vpop.xlane.xlu0 %1407
  %vm1409 = vcmp.eq.f32.partialorder %v304, %v1399
  %vm1410 = vcmp.eq.f32.partialorder %v304, %v1402
  %vm1411 = vcmp.eq.f32.partialorder %v304, %v1405
  %vm1412 = vcmp.eq.f32.partialorder %v304, %v1408
  %v1413 = vsel %vm1409, 1, 0
  %v1414 = vsel %vm1410, 1, 0
  %v1415 = vsel %vm1411, 1, 0
  %v1416 = vsel %vm1412, 1, 0
  %v1417 = vcvt.s32.f32 %v1413
  %v1418 = vcvt.s32.f32 %v1414
  %v1419 = vcvt.s32.f32 %v1415
  %v1420 = vcvt.s32.f32 %v1416
  %v1422 = vsel %vm108, %v1417, 0
  %v1425 = vsel %vm108, %v1418, 0
  %v1428 = vsel %vm108, %v1419, 0
  %v1431 = vsel %vm108, %v1420, 0
  %1433 = vmatpush.msra.mxu0 0.0
  %1434 = vmatpush.msra.mxu0 0.0
  %1435 = vmatpush.msra.mxu0 0.0
  %1436 = vmatpush.msra.mxu0 0.0
  %1437 = vmatpush.msra.mxu0 0.0
  %1438 = vmatpush.msra.mxu0 0.0
  %1439 = vmatpush.msra.mxu0 0.0
  %1440 = vmatpush.msra.mxu0 0.0
  %1441 = vmatpush.msra.mxu0 0.0
  %1442 = vmatpush.msra.mxu0 0.0
  %1443 = vmatpush.msra.mxu0 0.0
  %1444 = vmatpush.msra.mxu0 0.0
  %1445 = vmatpush.msra.mxu0 %v190
  %1446 = vmatpush.msra.mxu0 %v189
  %1447 = vmatpush.msra.mxu0 %v188
  %1448 = vmatpush.msra.mxu0 %v187
  %1449 = vmatmul.f32.gmra.mxu0 %v1422
  %v1450 = vpop.f32.mrf.mxu0
  %v1451 = vadd.f32 0.0, %v1450
  %1452 = vmatmul.f32.gmra.mxu0 %v1425
  %v1453 = vpop.f32.mrf.mxu0
  %v1454 = vadd.f32 0.0, %v1453
  %1455 = vmatmul.f32.gmra.mxu0 %v1428
  %v1456 = vpop.f32.mrf.mxu0
  %v1457 = vadd.f32 0.0, %v1456
  %1458 = vmatmul.f32.gmra.mxu0 %v1431
  %v1459 = vpop.f32.mrf.mxu0
  %v1460 = vadd.f32 0.0, %v1459
  %1461 = vdwg.mxu0
  %v1462 = vsub.f32 %v1451, %v176
  %v1463 = vsub.f32 %v1454, %v178
  %v1464 = vsub.f32 %v1457, %v180
  %v1465 = vsub.f32 %v1460, %v182
  %v1466 = vmul.f32 %v1462, %v1462
  %v1467 = vmul.f32 %v1463, %v1463
  %v1468 = vmul.f32 %v1464, %v1464
  %v1469 = vmul.f32 %v1465, %v1465
  %1474 = vrot.lane.b32.xlu0 %v1466, 96
  %v1475 = vpop.permute.xlu0 %1474
  %1476 = vrot.lane.b32.xlu0 %v1467, 96
  %v1477 = vpop.permute.xlu0 %1476
  %1478 = vrot.lane.b32.xlu0 %v1468, 96
  %v1479 = vpop.permute.xlu0 %1478
  %1480 = vrot.lane.b32.xlu0 %v1469, 96
  %v1481 = vpop.permute.xlu0 %1480
  %v1486 = vsel %vm195, %v1475, 0.0
  %1487 = vadd.xlane.f32.xlu0 %v1486
  %v1488 = vpop.xlane.xlu0 %1487
  %v1489 = vsel %vm195, %v1477, 0.0
  %1490 = vadd.xlane.f32.xlu0 %v1489
  %v1491 = vpop.xlane.xlu0 %1490
  %v1492 = vsel %vm195, %v1479, 0.0
  %1493 = vadd.xlane.f32.xlu0 %v1492
  %v1494 = vpop.xlane.xlu0 %1493
  %v1495 = vsel %vm195, %v1481, 0.0
  %1496 = vadd.xlane.f32.xlu0 %v1495
  %v1497 = vpop.xlane.xlu0 %1496
  %v1498 = vadd.f32 %v1488, 1e-12
  %v1499 = vadd.f32 %v1491, 1e-12
  %v1500 = vadd.f32 %v1494, 1e-12
  %v1501 = vadd.f32 %v1497, 1e-12
  %v1502 = vrsqrt.pop %v1498
  %v1503 = vmul.f32 %v1502, %v1498
  %v1504 = vmul.f32 %v1503, %v1502
  %v1505 = vmul.f32 0.5, %v1504
  %v1506 = vsub.f32 1.5, %v1505
  %v1507 = vmul.f32 %v1502, %v1506
  %vm1508 = vweird.f32 %v1498
  %vm1509 = vweird.f32 %v1502
  %vm1510 = vmor %vm1508, %vm1509
  %v1511 = vsel %vm1510, %v1502, %v1507
  %v1512 = vrsqrt.pop %v1499
  %v1513 = vmul.f32 %v1512, %v1499
  %v1514 = vmul.f32 %v1513, %v1512
  %v1515 = vmul.f32 0.5, %v1514
  %v1516 = vsub.f32 1.5, %v1515
  %v1517 = vmul.f32 %v1512, %v1516
  %vm1518 = vweird.f32 %v1499
  %vm1519 = vweird.f32 %v1512
  %vm1520 = vmor %vm1518, %vm1519
  %v1521 = vsel %vm1520, %v1512, %v1517
  %v1522 = vrsqrt.pop %v1500
  %v1523 = vmul.f32 %v1522, %v1500
  %v1524 = vmul.f32 %v1523, %v1522
  %v1525 = vmul.f32 0.5, %v1524
  %v1526 = vsub.f32 1.5, %v1525
  %v1527 = vmul.f32 %v1522, %v1526
  %vm1528 = vweird.f32 %v1500
  %vm1529 = vweird.f32 %v1522
  %vm1530 = vmor %vm1528, %vm1529
  %v1531 = vsel %vm1530, %v1522, %v1527
  %v1532 = vrsqrt.pop %v1501
  %v1533 = vmul.f32 %v1532, %v1501
  %v1534 = vmul.f32 %v1533, %v1532
  %v1535 = vmul.f32 0.5, %v1534
  %v1536 = vsub.f32 1.5, %v1535
  %v1537 = vmul.f32 %v1532, %v1536
  %vm1538 = vweird.f32 %v1501
  %vm1539 = vweird.f32 %v1532
  %vm1540 = vmor %vm1538, %vm1539
  %v1541 = vsel %vm1540, %v1532, %v1537
  %v1542 = vmul.f32 %v1488, %v503
  %v1543 = vmul.f32 %v1491, %v503
  %v1544 = vmul.f32 %v1494, %v503
  %v1545 = vmul.f32 %v1497, %v503
  %1547 = vset.pattern.permute.xlu0 32
  %1548 = vperm.xlu0 %1547, %v1462
  %v1549 = vpop.permute.xlu0 %1548
  %1552 = vset.pattern.permute.xlu0 32
  %1553 = vperm.xlu0 %1552, %v1463
  %v1554 = vpop.permute.xlu0 %1553
  %1557 = vset.pattern.permute.xlu0 32
  %1558 = vperm.xlu0 %1557, %v1464
  %v1559 = vpop.permute.xlu0 %1558
  %1562 = vset.pattern.permute.xlu0 32
  %1563 = vperm.xlu0 %1562, %v1465
  %v1564 = vpop.permute.xlu0 %1563
  %v1566 = vmul.f32 %v1549, %v528
  %v1567 = vmul.f32 %v1554, %v528
  %v1568 = vmul.f32 %v1559, %v528
  %v1569 = vmul.f32 %v1564, %v528
  %v1570 = vadd.f32 %v1542, %v1566
  %v1571 = vadd.f32 %v1543, %v1567
  %v1572 = vadd.f32 %v1544, %v1568
  %v1573 = vadd.f32 %v1545, %v1569
  %1574 = vset.pattern.permute.xlu0 33
  %1575 = vperm.xlu0 %1574, %v1462
  %v1576 = vpop.permute.xlu0 %1575
  %1578 = vset.pattern.permute.xlu0 33
  %1579 = vperm.xlu0 %1578, %v1463
  %v1580 = vpop.permute.xlu0 %1579
  %1582 = vset.pattern.permute.xlu0 33
  %1583 = vperm.xlu0 %1582, %v1464
  %v1584 = vpop.permute.xlu0 %1583
  %1586 = vset.pattern.permute.xlu0 33
  %1587 = vperm.xlu0 %1586, %v1465
  %v1588 = vpop.permute.xlu0 %1587
  %v1590 = vmul.f32 %v1576, %v553
  %v1591 = vmul.f32 %v1580, %v553
  %v1592 = vmul.f32 %v1584, %v553
  %v1593 = vmul.f32 %v1588, %v553
  %v1594 = vadd.f32 %v1570, %v1590
  %v1595 = vadd.f32 %v1571, %v1591
  %v1596 = vadd.f32 %v1572, %v1592
  %v1597 = vadd.f32 %v1573, %v1593
  %1598 = vset.pattern.permute.xlu0 34
  %1599 = vperm.xlu0 %1598, %v1462
  %v1600 = vpop.permute.xlu0 %1599
  %1602 = vset.pattern.permute.xlu0 34
  %1603 = vperm.xlu0 %1602, %v1463
  %v1604 = vpop.permute.xlu0 %1603
  %1606 = vset.pattern.permute.xlu0 34
  %1607 = vperm.xlu0 %1606, %v1464
  %v1608 = vpop.permute.xlu0 %1607
  %1610 = vset.pattern.permute.xlu0 34
  %1611 = vperm.xlu0 %1610, %v1465
  %v1612 = vpop.permute.xlu0 %1611
  %v1614 = vmul.f32 %v1600, %v578
  %v1615 = vmul.f32 %v1604, %v578
  %v1616 = vmul.f32 %v1608, %v578
  %v1617 = vmul.f32 %v1612, %v578
  %v1618 = vadd.f32 %v1594, %v1614
  %v1619 = vadd.f32 %v1595, %v1615
  %v1620 = vadd.f32 %v1596, %v1616
  %v1621 = vadd.f32 %v1597, %v1617
  %v1622 = vadd.f32 %v151, %v1451
  %v1623 = vadd.f32 %v152, %v1454
  %v1624 = vadd.f32 %v153, %v1457
  %v1625 = vadd.f32 %v154, %v1460
  %v1626 = vmul.f32 %v1511, %v1618
  %v1627 = vmul.f32 %v1521, %v1619
  %v1628 = vmul.f32 %v1531, %v1620
  %v1629 = vmul.f32 %v1541, %v1621
  %v1630 = vadd.f32 %v1622, %v1626
  %v1631 = vadd.f32 %v1623, %v1627
  %v1632 = vadd.f32 %v1624, %v1628
  %v1633 = vadd.f32 %v1625, %v1629
  %v1634 = vxor.u32 %v1630, 2147483648
  %v1635 = vxor.u32 %v1631, 2147483648
  %v1636 = vxor.u32 %v1632, 2147483648
  %v1637 = vxor.u32 %v1633, 2147483648
  %v1638 = vmul.f32 %v1634, 1.442695
  %v1639 = vpow.pop %v1638
  %v1640 = vmul.f32 %v1635, 1.442695
  %v1641 = vpow.pop %v1640
  %v1642 = vmul.f32 %v1636, 1.442695
  %v1643 = vpow.pop %v1642
  %v1644 = vmul.f32 %v1637, 1.442695
  %v1645 = vpow.pop %v1644
  %v1646 = vadd.f32 %v1639, 1.0
  %v1647 = vadd.f32 %v1641, 1.0
  %v1648 = vadd.f32 %v1643, 1.0
  %v1649 = vadd.f32 %v1645, 1.0
  %v1650 = vrcp.pop %v1646
  %v1651 = vmul.f32 %v1646, %v1650
  %v1652 = vsub.f32 1.0, %v1651
  %v1653 = vmul.f32 %v1650, %v1652
  %v1654 = vadd.f32 %v1650, %v1653
  %vm1655 = vweird.f32 %v1646
  %vm1656 = vweird.f32 %v1650
  %vm1657 = vmor %vm1655, %vm1656
  %v1658 = vsel %vm1657, %v1650, %v1654
  %v1659 = vand.u32 2147483647, %v1646
  %vm1660 = vcmp.eq.f32.partialorder %v1659, 8.507059e+37
  %v1661 = vand.u32 %v1646, 2147483648
  %v1662 = vor.u32 1.1754944e-38, %v1661
  %v1663 = vsel %vm1660, %v1662, %v1658
  %v1664 = vmul.f32 1.0, %v1663
  %v1665 = vrcp.pop %v1647
  %v1666 = vmul.f32 %v1647, %v1665
  %v1667 = vsub.f32 1.0, %v1666
  %v1668 = vmul.f32 %v1665, %v1667
  %v1669 = vadd.f32 %v1665, %v1668
  %vm1670 = vweird.f32 %v1647
  %vm1671 = vweird.f32 %v1665
  %vm1672 = vmor %vm1670, %vm1671
  %v1673 = vsel %vm1672, %v1665, %v1669
  %v1674 = vand.u32 2147483647, %v1647
  %vm1675 = vcmp.eq.f32.partialorder %v1674, 8.507059e+37
  %v1676 = vand.u32 %v1647, 2147483648
  %v1677 = vor.u32 1.1754944e-38, %v1676
  %v1678 = vsel %vm1675, %v1677, %v1673
  %v1679 = vmul.f32 1.0, %v1678
  %v1680 = vrcp.pop %v1648
  %v1681 = vmul.f32 %v1648, %v1680
  %v1682 = vsub.f32 1.0, %v1681
  %v1683 = vmul.f32 %v1680, %v1682
  %v1684 = vadd.f32 %v1680, %v1683
  %vm1685 = vweird.f32 %v1648
  %vm1686 = vweird.f32 %v1680
  %vm1687 = vmor %vm1685, %vm1686
  %v1688 = vsel %vm1687, %v1680, %v1684
  %v1689 = vand.u32 2147483647, %v1648
  %vm1690 = vcmp.eq.f32.partialorder %v1689, 8.507059e+37
  %v1691 = vand.u32 %v1648, 2147483648
  %v1692 = vor.u32 1.1754944e-38, %v1691
  %v1693 = vsel %vm1690, %v1692, %v1688
  %v1694 = vmul.f32 1.0, %v1693
  %v1695 = vrcp.pop %v1649
  %v1696 = vmul.f32 %v1649, %v1695
  %v1697 = vsub.f32 1.0, %v1696
  %v1698 = vmul.f32 %v1695, %v1697
  %v1699 = vadd.f32 %v1695, %v1698
  %vm1700 = vweird.f32 %v1649
  %vm1701 = vweird.f32 %v1695
  %vm1702 = vmor %vm1700, %vm1701
  %v1703 = vsel %vm1702, %v1695, %v1699
  %v1704 = vand.u32 2147483647, %v1649
  %vm1705 = vcmp.eq.f32.partialorder %v1704, 8.507059e+37
  %v1706 = vand.u32 %v1649, 2147483648
  %v1707 = vor.u32 1.1754944e-38, %v1706
  %v1708 = vsel %vm1705, %v1707, %v1703
  %v1709 = vmul.f32 1.0, %v1708
  %v1710 = vmul.f32 %v1630, %v1664
  %v1711 = vmul.f32 %v1631, %v1679
  %v1712 = vmul.f32 %v1632, %v1694
  %v1713 = vmul.f32 %v1633, %v1709
  %v1714 = vadd.f32 %v1369, %v1710
  %v1715 = vadd.f32 %v1370, %v1711
  %v1716 = vadd.f32 %v1371, %v1712
  %v1717 = vadd.f32 %v1372, %v1713
  %v1718 = vsel %vm1409, 1e+30, %v1373
  %v1719 = vsel %vm1410, 1e+30, %v1374
  %v1720 = vsel %vm1411, 1e+30, %v1375
  %v1721 = vsel %vm1412, 1e+30, %v1376
  %v1722 = vsel %vm108, %v1718, inf
  %1723 = vmin.xlane.f32.xlu0 %v1722
  %v1724 = vpop.xlane.xlu0 %1723
  %v1725 = vsel %vm108, %v1719, inf
  %1726 = vmin.xlane.f32.xlu0 %v1725
  %v1727 = vpop.xlane.xlu0 %1726
  %v1728 = vsel %vm108, %v1720, inf
  %1729 = vmin.xlane.f32.xlu0 %v1728
  %v1730 = vpop.xlane.xlu0 %1729
  %v1731 = vsel %vm108, %v1721, inf
  %1732 = vmin.xlane.f32.xlu0 %v1731
  %v1733 = vpop.xlane.xlu0 %1732
  %vm1734 = vcmp.le.f32.partialorder %v1718, %v1724
  %vm1735 = vcmp.le.f32.partialorder %v1719, %v1727
  %vm1736 = vcmp.le.f32.partialorder %v1720, %v1730
  %vm1737 = vcmp.le.f32.partialorder %v1721, %v1733
  %v1738 = vsel %vm1734, %v304, 32.0
  %v1739 = vsel %vm1735, %v304, 32.0
  %v1740 = vsel %vm1736, %v304, 32.0
  %v1741 = vsel %vm1737, %v304, 32.0
  %v1742 = vsel %vm108, %v1738, inf
  %1743 = vmin.xlane.f32.xlu0 %v1742
  %v1744 = vpop.xlane.xlu0 %1743
  %v1745 = vsel %vm108, %v1739, inf
  %1746 = vmin.xlane.f32.xlu0 %v1745
  %v1747 = vpop.xlane.xlu0 %1746
  %v1748 = vsel %vm108, %v1740, inf
  %1749 = vmin.xlane.f32.xlu0 %v1748
  %v1750 = vpop.xlane.xlu0 %1749
  %v1751 = vsel %vm108, %v1741, inf
  %1752 = vmin.xlane.f32.xlu0 %v1751
  %v1753 = vpop.xlane.xlu0 %1752
  %vm1754 = vcmp.eq.f32.partialorder %v304, %v1744
  %vm1755 = vcmp.eq.f32.partialorder %v304, %v1747
  %vm1756 = vcmp.eq.f32.partialorder %v304, %v1750
  %vm1757 = vcmp.eq.f32.partialorder %v304, %v1753
  %v1758 = vsel %vm1754, 1, 0
  %v1759 = vsel %vm1755, 1, 0
  %v1760 = vsel %vm1756, 1, 0
  %v1761 = vsel %vm1757, 1, 0
  %v1762 = vcvt.s32.f32 %v1758
  %v1763 = vcvt.s32.f32 %v1759
  %v1764 = vcvt.s32.f32 %v1760
  %v1765 = vcvt.s32.f32 %v1761
  %v1767 = vsel %vm108, %v1762, 0
  %v1770 = vsel %vm108, %v1763, 0
  %v1773 = vsel %vm108, %v1764, 0
  %v1776 = vsel %vm108, %v1765, 0
  %1778 = vmatpush.msra.mxu0 0.0
  %1779 = vmatpush.msra.mxu0 0.0
  %1780 = vmatpush.msra.mxu0 0.0
  %1781 = vmatpush.msra.mxu0 0.0
  %1782 = vmatpush.msra.mxu0 0.0
  %1783 = vmatpush.msra.mxu0 0.0
  %1784 = vmatpush.msra.mxu0 0.0
  %1785 = vmatpush.msra.mxu0 0.0
  %1786 = vmatpush.msra.mxu0 0.0
  %1787 = vmatpush.msra.mxu0 0.0
  %1788 = vmatpush.msra.mxu0 0.0
  %1789 = vmatpush.msra.mxu0 0.0
  %1790 = vmatpush.msra.mxu0 %v190
  %1791 = vmatpush.msra.mxu0 %v189
  %1792 = vmatpush.msra.mxu0 %v188
  %1793 = vmatpush.msra.mxu0 %v187
  %1794 = vmatmul.f32.gmra.mxu0 %v1767
  %v1795 = vpop.f32.mrf.mxu0
  %v1796 = vadd.f32 0.0, %v1795
  %1797 = vmatmul.f32.gmra.mxu0 %v1770
  %v1798 = vpop.f32.mrf.mxu0
  %v1799 = vadd.f32 0.0, %v1798
  %1800 = vmatmul.f32.gmra.mxu0 %v1773
  %v1801 = vpop.f32.mrf.mxu0
  %v1802 = vadd.f32 0.0, %v1801
  %1803 = vmatmul.f32.gmra.mxu0 %v1776
  %v1804 = vpop.f32.mrf.mxu0
  %v1805 = vadd.f32 0.0, %v1804
  %1806 = vdwg.mxu0
  %v1807 = vsub.f32 %v1796, %v176
  %v1808 = vsub.f32 %v1799, %v178
  %v1809 = vsub.f32 %v1802, %v180
  %v1810 = vsub.f32 %v1805, %v182
  %v1811 = vmul.f32 %v1807, %v1807
  %v1812 = vmul.f32 %v1808, %v1808
  %v1813 = vmul.f32 %v1809, %v1809
  %v1814 = vmul.f32 %v1810, %v1810
  %1819 = vrot.lane.b32.xlu0 %v1811, 96
  %v1820 = vpop.permute.xlu0 %1819
  %1821 = vrot.lane.b32.xlu0 %v1812, 96
  %v1822 = vpop.permute.xlu0 %1821
  %1823 = vrot.lane.b32.xlu0 %v1813, 96
  %v1824 = vpop.permute.xlu0 %1823
  %1825 = vrot.lane.b32.xlu0 %v1814, 96
  %v1826 = vpop.permute.xlu0 %1825
  %v1831 = vsel %vm195, %v1820, 0.0
  %1832 = vadd.xlane.f32.xlu0 %v1831
  %v1833 = vpop.xlane.xlu0 %1832
  %v1834 = vsel %vm195, %v1822, 0.0
  %1835 = vadd.xlane.f32.xlu0 %v1834
  %v1836 = vpop.xlane.xlu0 %1835
  %v1837 = vsel %vm195, %v1824, 0.0
  %1838 = vadd.xlane.f32.xlu0 %v1837
  %v1839 = vpop.xlane.xlu0 %1838
  %v1840 = vsel %vm195, %v1826, 0.0
  %1841 = vadd.xlane.f32.xlu0 %v1840
  %v1842 = vpop.xlane.xlu0 %1841
  %v1843 = vadd.f32 %v1833, 1e-12
  %v1844 = vadd.f32 %v1836, 1e-12
  %v1845 = vadd.f32 %v1839, 1e-12
  %v1846 = vadd.f32 %v1842, 1e-12
  %v1847 = vrsqrt.pop %v1843
  %v1848 = vmul.f32 %v1847, %v1843
  %v1849 = vmul.f32 %v1848, %v1847
  %v1850 = vmul.f32 0.5, %v1849
  %v1851 = vsub.f32 1.5, %v1850
  %v1852 = vmul.f32 %v1847, %v1851
  %vm1853 = vweird.f32 %v1843
  %vm1854 = vweird.f32 %v1847
  %vm1855 = vmor %vm1853, %vm1854
  %v1856 = vsel %vm1855, %v1847, %v1852
  %v1857 = vrsqrt.pop %v1844
  %v1858 = vmul.f32 %v1857, %v1844
  %v1859 = vmul.f32 %v1858, %v1857
  %v1860 = vmul.f32 0.5, %v1859
  %v1861 = vsub.f32 1.5, %v1860
  %v1862 = vmul.f32 %v1857, %v1861
  %vm1863 = vweird.f32 %v1844
  %vm1864 = vweird.f32 %v1857
  %vm1865 = vmor %vm1863, %vm1864
  %v1866 = vsel %vm1865, %v1857, %v1862
  %v1867 = vrsqrt.pop %v1845
  %v1868 = vmul.f32 %v1867, %v1845
  %v1869 = vmul.f32 %v1868, %v1867
  %v1870 = vmul.f32 0.5, %v1869
  %v1871 = vsub.f32 1.5, %v1870
  %v1872 = vmul.f32 %v1867, %v1871
  %vm1873 = vweird.f32 %v1845
  %vm1874 = vweird.f32 %v1867
  %vm1875 = vmor %vm1873, %vm1874
  %v1876 = vsel %vm1875, %v1867, %v1872
  %v1877 = vrsqrt.pop %v1846
  %v1878 = vmul.f32 %v1877, %v1846
  %v1879 = vmul.f32 %v1878, %v1877
  %v1880 = vmul.f32 0.5, %v1879
  %v1881 = vsub.f32 1.5, %v1880
  %v1882 = vmul.f32 %v1877, %v1881
  %vm1883 = vweird.f32 %v1846
  %vm1884 = vweird.f32 %v1877
  %vm1885 = vmor %vm1883, %vm1884
  %v1886 = vsel %vm1885, %v1877, %v1882
  %v1887 = vmul.f32 %v1833, %v503
  %v1888 = vmul.f32 %v1836, %v503
  %v1889 = vmul.f32 %v1839, %v503
  %v1890 = vmul.f32 %v1842, %v503
  %1892 = vset.pattern.permute.xlu0 32
  %1893 = vperm.xlu0 %1892, %v1807
  %v1894 = vpop.permute.xlu0 %1893
  %1897 = vset.pattern.permute.xlu0 32
  %1898 = vperm.xlu0 %1897, %v1808
  %v1899 = vpop.permute.xlu0 %1898
  %1902 = vset.pattern.permute.xlu0 32
  %1903 = vperm.xlu0 %1902, %v1809
  %v1904 = vpop.permute.xlu0 %1903
  %1907 = vset.pattern.permute.xlu0 32
  %1908 = vperm.xlu0 %1907, %v1810
  %v1909 = vpop.permute.xlu0 %1908
  %v1911 = vmul.f32 %v1894, %v528
  %v1912 = vmul.f32 %v1899, %v528
  %v1913 = vmul.f32 %v1904, %v528
  %v1914 = vmul.f32 %v1909, %v528
  %v1915 = vadd.f32 %v1887, %v1911
  %v1916 = vadd.f32 %v1888, %v1912
  %v1917 = vadd.f32 %v1889, %v1913
  %v1918 = vadd.f32 %v1890, %v1914
  %1919 = vset.pattern.permute.xlu0 33
  %1920 = vperm.xlu0 %1919, %v1807
  %v1921 = vpop.permute.xlu0 %1920
  %1923 = vset.pattern.permute.xlu0 33
  %1924 = vperm.xlu0 %1923, %v1808
  %v1925 = vpop.permute.xlu0 %1924
  %1927 = vset.pattern.permute.xlu0 33
  %1928 = vperm.xlu0 %1927, %v1809
  %v1929 = vpop.permute.xlu0 %1928
  %1931 = vset.pattern.permute.xlu0 33
  %1932 = vperm.xlu0 %1931, %v1810
  %v1933 = vpop.permute.xlu0 %1932
  %v1935 = vmul.f32 %v1921, %v553
  %v1936 = vmul.f32 %v1925, %v553
  %v1937 = vmul.f32 %v1929, %v553
  %v1938 = vmul.f32 %v1933, %v553
  %v1939 = vadd.f32 %v1915, %v1935
  %v1940 = vadd.f32 %v1916, %v1936
  %v1941 = vadd.f32 %v1917, %v1937
  %v1942 = vadd.f32 %v1918, %v1938
  %1943 = vset.pattern.permute.xlu0 34
  %1944 = vperm.xlu0 %1943, %v1807
  %v1945 = vpop.permute.xlu0 %1944
  %1947 = vset.pattern.permute.xlu0 34
  %1948 = vperm.xlu0 %1947, %v1808
  %v1949 = vpop.permute.xlu0 %1948
  %1951 = vset.pattern.permute.xlu0 34
  %1952 = vperm.xlu0 %1951, %v1809
  %v1953 = vpop.permute.xlu0 %1952
  %1955 = vset.pattern.permute.xlu0 34
  %1956 = vperm.xlu0 %1955, %v1810
  %v1957 = vpop.permute.xlu0 %1956
  %v1959 = vmul.f32 %v1945, %v578
  %v1960 = vmul.f32 %v1949, %v578
  %v1961 = vmul.f32 %v1953, %v578
  %v1962 = vmul.f32 %v1957, %v578
  %v1963 = vadd.f32 %v1939, %v1959
  %v1964 = vadd.f32 %v1940, %v1960
  %v1965 = vadd.f32 %v1941, %v1961
  %v1966 = vadd.f32 %v1942, %v1962
  %v1967 = vadd.f32 %v151, %v1796
  %v1968 = vadd.f32 %v152, %v1799
  %v1969 = vadd.f32 %v153, %v1802
  %v1970 = vadd.f32 %v154, %v1805
  %v1971 = vmul.f32 %v1856, %v1963
  %v1972 = vmul.f32 %v1866, %v1964
  %v1973 = vmul.f32 %v1876, %v1965
  %v1974 = vmul.f32 %v1886, %v1966
  %v1975 = vadd.f32 %v1967, %v1971
  %v1976 = vadd.f32 %v1968, %v1972
  %v1977 = vadd.f32 %v1969, %v1973
  %v1978 = vadd.f32 %v1970, %v1974
  %v1979 = vxor.u32 %v1975, 2147483648
  %v1980 = vxor.u32 %v1976, 2147483648
  %v1981 = vxor.u32 %v1977, 2147483648
  %v1982 = vxor.u32 %v1978, 2147483648
  %v1983 = vmul.f32 %v1979, 1.442695
  %v1984 = vpow.pop %v1983
  %v1985 = vmul.f32 %v1980, 1.442695
  %v1986 = vpow.pop %v1985
  %v1987 = vmul.f32 %v1981, 1.442695
  %v1988 = vpow.pop %v1987
  %v1989 = vmul.f32 %v1982, 1.442695
  %v1990 = vpow.pop %v1989
  %v1991 = vadd.f32 %v1984, 1.0
  %v1992 = vadd.f32 %v1986, 1.0
  %v1993 = vadd.f32 %v1988, 1.0
  %v1994 = vadd.f32 %v1990, 1.0
  %v1995 = vrcp.pop %v1991
  %v1996 = vmul.f32 %v1991, %v1995
  %v1997 = vsub.f32 1.0, %v1996
  %v1998 = vmul.f32 %v1995, %v1997
  %v1999 = vadd.f32 %v1995, %v1998
  %vm2000 = vweird.f32 %v1991
  %vm2001 = vweird.f32 %v1995
  %vm2002 = vmor %vm2000, %vm2001
  %v2003 = vsel %vm2002, %v1995, %v1999
  %v2004 = vand.u32 2147483647, %v1991
  %vm2005 = vcmp.eq.f32.partialorder %v2004, 8.507059e+37
  %v2006 = vand.u32 %v1991, 2147483648
  %v2007 = vor.u32 1.1754944e-38, %v2006
  %v2008 = vsel %vm2005, %v2007, %v2003
  %v2009 = vmul.f32 1.0, %v2008
  %v2010 = vrcp.pop %v1992
  %v2011 = vmul.f32 %v1992, %v2010
  %v2012 = vsub.f32 1.0, %v2011
  %v2013 = vmul.f32 %v2010, %v2012
  %v2014 = vadd.f32 %v2010, %v2013
  %vm2015 = vweird.f32 %v1992
  %vm2016 = vweird.f32 %v2010
  %vm2017 = vmor %vm2015, %vm2016
  %v2018 = vsel %vm2017, %v2010, %v2014
  %v2019 = vand.u32 2147483647, %v1992
  %vm2020 = vcmp.eq.f32.partialorder %v2019, 8.507059e+37
  %v2021 = vand.u32 %v1992, 2147483648
  %v2022 = vor.u32 1.1754944e-38, %v2021
  %v2023 = vsel %vm2020, %v2022, %v2018
  %v2024 = vmul.f32 1.0, %v2023
  %v2025 = vrcp.pop %v1993
  %v2026 = vmul.f32 %v1993, %v2025
  %v2027 = vsub.f32 1.0, %v2026
  %v2028 = vmul.f32 %v2025, %v2027
  %v2029 = vadd.f32 %v2025, %v2028
  %vm2030 = vweird.f32 %v1993
  %vm2031 = vweird.f32 %v2025
  %vm2032 = vmor %vm2030, %vm2031
  %v2033 = vsel %vm2032, %v2025, %v2029
  %v2034 = vand.u32 2147483647, %v1993
  %vm2035 = vcmp.eq.f32.partialorder %v2034, 8.507059e+37
  %v2036 = vand.u32 %v1993, 2147483648
  %v2037 = vor.u32 1.1754944e-38, %v2036
  %v2038 = vsel %vm2035, %v2037, %v2033
  %v2039 = vmul.f32 1.0, %v2038
  %v2040 = vrcp.pop %v1994
  %v2041 = vmul.f32 %v1994, %v2040
  %v2042 = vsub.f32 1.0, %v2041
  %v2043 = vmul.f32 %v2040, %v2042
  %v2044 = vadd.f32 %v2040, %v2043
  %vm2045 = vweird.f32 %v1994
  %vm2046 = vweird.f32 %v2040
  %vm2047 = vmor %vm2045, %vm2046
  %v2048 = vsel %vm2047, %v2040, %v2044
  %v2049 = vand.u32 2147483647, %v1994
  %vm2050 = vcmp.eq.f32.partialorder %v2049, 8.507059e+37
  %v2051 = vand.u32 %v1994, 2147483648
  %v2052 = vor.u32 1.1754944e-38, %v2051
  %v2053 = vsel %vm2050, %v2052, %v2048
  %v2054 = vmul.f32 1.0, %v2053
  %v2055 = vmul.f32 %v1975, %v2009
  %v2056 = vmul.f32 %v1976, %v2024
  %v2057 = vmul.f32 %v1977, %v2039
  %v2058 = vmul.f32 %v1978, %v2054
  %v2059 = vadd.f32 %v1714, %v2055
  %v2060 = vadd.f32 %v1715, %v2056
  %v2061 = vadd.f32 %v1716, %v2057
  %v2062 = vadd.f32 %v1717, %v2058
  %v2063 = vmul.f32 %v2059, 0.2
  %v2064 = vmul.f32 %v2060, 0.2
  %v2065 = vmul.f32 %v2061, 0.2
  %v2066 = vmul.f32 %v2062, 0.2
  %v2067 = vperm.slane %v55, 2
  %2069 = vrot.lane.b32.xlu0 %v2067, 64
  %v2070 = vpop.permute.xlu0 %2069
  %v2072 = vadd.f32 %v139, %v2070
  %v2073 = vadd.f32 %v142, %v2070
  %v2074 = vadd.f32 %v145, %v2070
  %v2075 = vadd.f32 %v148, %v2070
  %v2076 = vld [vmem:[%s5] sm:$0xff]
  %v2077 = vld [vmem:[%s5 + $0x8] sm:$0xff]
  %v2078 = vld [vmem:[%s5 + $0x10] sm:$0xff]
  %v2079 = vld [vmem:[%s5 + $0x18] sm:$0xff]
  %v2081 = vsel %vm108, %v2063, 0
  %v2084 = vsel %vm108, %v2064, 0
  %v2087 = vsel %vm108, %v2065, 0
  %v2090 = vsel %vm108, %v2066, 0
  %2092 = vmatpush.msra.mxu0 0.0
  %2093 = vmatpush.msra.mxu0 0.0
  %2094 = vmatpush.msra.mxu0 0.0
  %2095 = vmatpush.msra.mxu0 0.0
  %2096 = vmatpush.msra.mxu0 0.0
  %2097 = vmatpush.msra.mxu0 0.0
  %2098 = vmatpush.msra.mxu0 0.0
  %2099 = vmatpush.msra.mxu0 0.0
  %2100 = vmatpush.msra.mxu0 0.0
  %2101 = vmatpush.msra.mxu0 0.0
  %2102 = vmatpush.msra.mxu0 0.0
  %2103 = vmatpush.msra.mxu0 0.0
  %2104 = vmatpush.msra.mxu0 %v2079
  %2105 = vmatpush.msra.mxu0 %v2078
  %2106 = vmatpush.msra.mxu0 %v2077
  %2107 = vmatpush.msra.mxu0 %v2076
  %2108 = vmatmul.f32.gmra.mxu0 %v2081
  %v2109 = vpop.f32.mrf.mxu0
  %v2110 = vadd.f32 0.0, %v2109
  %2111 = vmatmul.f32.gmra.mxu0 %v2084
  %v2112 = vpop.f32.mrf.mxu0
  %v2113 = vadd.f32 0.0, %v2112
  %2114 = vmatmul.f32.gmra.mxu0 %v2087
  %v2115 = vpop.f32.mrf.mxu0
  %v2116 = vadd.f32 0.0, %v2115
  %2117 = vmatmul.f32.gmra.mxu0 %v2090
  %v2118 = vpop.f32.mrf.mxu0
  %v2119 = vadd.f32 0.0, %v2118
  %2120 = vdwg.mxu0
  %2125 = vrot.lane.b32.xlu0 %v2110, 64
  %v2126 = vpop.permute.xlu0 %2125
  %2127 = vrot.lane.b32.xlu0 %v2113, 64
  %v2128 = vpop.permute.xlu0 %2127
  %2129 = vrot.lane.b32.xlu0 %v2116, 64
  %v2130 = vpop.permute.xlu0 %2129
  %2131 = vrot.lane.b32.xlu0 %v2119, 64
  %v2132 = vpop.permute.xlu0 %2131
  %v2137 = vadd.f32 %v2072, %v2126
  %v2138 = vadd.f32 %v2073, %v2128
  %v2139 = vadd.f32 %v2074, %v2130
  %v2140 = vadd.f32 %v2075, %v2132
  %v2141 = vxor.u32 %v2137, 2147483648
  %v2142 = vxor.u32 %v2138, 2147483648
  %v2143 = vxor.u32 %v2139, 2147483648
  %v2144 = vxor.u32 %v2140, 2147483648
  %v2145 = vmul.f32 %v2141, 1.442695
  %v2146 = vpow.pop %v2145
  %v2147 = vmul.f32 %v2142, 1.442695
  %v2148 = vpow.pop %v2147
  %v2149 = vmul.f32 %v2143, 1.442695
  %v2150 = vpow.pop %v2149
  %v2151 = vmul.f32 %v2144, 1.442695
  %v2152 = vpow.pop %v2151
  %v2153 = vadd.f32 %v2146, 1.0
  %v2154 = vadd.f32 %v2148, 1.0
  %v2155 = vadd.f32 %v2150, 1.0
  %v2156 = vadd.f32 %v2152, 1.0
  %v2157 = vrcp.pop %v2153
  %v2158 = vmul.f32 %v2153, %v2157
  %v2159 = vsub.f32 1.0, %v2158
  %v2160 = vmul.f32 %v2157, %v2159
  %v2161 = vadd.f32 %v2157, %v2160
  %vm2162 = vweird.f32 %v2153
  %vm2163 = vweird.f32 %v2157
  %vm2164 = vmor %vm2162, %vm2163
  %v2165 = vsel %vm2164, %v2157, %v2161
  %v2166 = vand.u32 2147483647, %v2153
  %vm2167 = vcmp.eq.f32.partialorder %v2166, 8.507059e+37
  %v2168 = vand.u32 %v2153, 2147483648
  %v2169 = vor.u32 1.1754944e-38, %v2168
  %v2170 = vsel %vm2167, %v2169, %v2165
  %v2171 = vmul.f32 1.0, %v2170
  %v2172 = vrcp.pop %v2154
  %v2173 = vmul.f32 %v2154, %v2172
  %v2174 = vsub.f32 1.0, %v2173
  %v2175 = vmul.f32 %v2172, %v2174
  %v2176 = vadd.f32 %v2172, %v2175
  %vm2177 = vweird.f32 %v2154
  %vm2178 = vweird.f32 %v2172
  %vm2179 = vmor %vm2177, %vm2178
  %v2180 = vsel %vm2179, %v2172, %v2176
  %v2181 = vand.u32 2147483647, %v2154
  %vm2182 = vcmp.eq.f32.partialorder %v2181, 8.507059e+37
  %v2183 = vand.u32 %v2154, 2147483648
  %v2184 = vor.u32 1.1754944e-38, %v2183
  %v2185 = vsel %vm2182, %v2184, %v2180
  %v2186 = vmul.f32 1.0, %v2185
  %v2187 = vrcp.pop %v2155
  %v2188 = vmul.f32 %v2155, %v2187
  %v2189 = vsub.f32 1.0, %v2188
  %v2190 = vmul.f32 %v2187, %v2189
  %v2191 = vadd.f32 %v2187, %v2190
  %vm2192 = vweird.f32 %v2155
  %vm2193 = vweird.f32 %v2187
  %vm2194 = vmor %vm2192, %vm2193
  %v2195 = vsel %vm2194, %v2187, %v2191
  %v2196 = vand.u32 2147483647, %v2155
  %vm2197 = vcmp.eq.f32.partialorder %v2196, 8.507059e+37
  %v2198 = vand.u32 %v2155, 2147483648
  %v2199 = vor.u32 1.1754944e-38, %v2198
  %v2200 = vsel %vm2197, %v2199, %v2195
  %v2201 = vmul.f32 1.0, %v2200
  %v2202 = vrcp.pop %v2156
  %v2203 = vmul.f32 %v2156, %v2202
  %v2204 = vsub.f32 1.0, %v2203
  %v2205 = vmul.f32 %v2202, %v2204
  %v2206 = vadd.f32 %v2202, %v2205
  %vm2207 = vweird.f32 %v2156
  %vm2208 = vweird.f32 %v2202
  %vm2209 = vmor %vm2207, %vm2208
  %v2210 = vsel %vm2209, %v2202, %v2206
  %v2211 = vand.u32 2147483647, %v2156
  %vm2212 = vcmp.eq.f32.partialorder %v2211, 8.507059e+37
  %v2213 = vand.u32 %v2156, 2147483648
  %v2214 = vor.u32 1.1754944e-38, %v2213
  %v2215 = vsel %vm2212, %v2214, %v2210
  %v2216 = vmul.f32 1.0, %v2215
  %v2217 = vmul.f32 %v2137, %v2171
  %v2218 = vmul.f32 %v2138, %v2186
  %v2219 = vmul.f32 %v2139, %v2201
  %v2220 = vmul.f32 %v2140, %v2216
  %vm2221 = vcmask 785920
  %v2222 = vsel %vm2221, %v2217, 0.0
  %v2223 = vsel %vm2221, %v2218, 0.0
  %v2224 = vadd.f32 %v2222, %v2223
  %v2225 = vrot.slane %v2224, 4
  %v2226 = vadd.f32 %v2224, %v2225
  %v2227 = vrot.slane %v2226, 2
  %v2228 = vadd.f32 %v2226, %v2227
  %v2229 = vrot.slane %v2228, 1
  %v2230 = vadd.f32 %v2228, %v2229
  %v2231 = vsel %vm2221, %v2219, 0.0
  %v2232 = vsel %vm2221, %v2220, 0.0
  %v2233 = vadd.f32 %v2231, %v2232
  %v2234 = vrot.slane %v2233, 4
  %v2235 = vadd.f32 %v2233, %v2234
  %v2236 = vrot.slane %v2235, 2
  %v2237 = vadd.f32 %v2235, %v2236
  %v2238 = vrot.slane %v2237, 1
  %v2239 = vadd.f32 %v2237, %v2238
  %v2240 = vmul.f32 %v2230, 0.0625
  %v2241 = vmul.f32 %v2239, 0.0625
  %v2242 = vld [vmem:[%s6] sm:$0xff]
  %v2243 = vld [vmem:[%s6 + $0x8] sm:$0xff]
  %v2244 = vld [vmem:[%s6 + $0x10] sm:$0xff]
  %v2245 = vld [vmem:[%s6 + $0x18] sm:$0xff]
  %v2246 = vld [vmem:[%s10] sm:$0x1]
  %v2248 = vperm.slane %v2246, 0
  %vm2252 = vcmask 1041409
  %v2253 = vsel %vm2252, %v2241, %v2240
  %2254 = vrot.lane.b32.xlu0 %v2253, 64
  %v2255 = vpop.permute.xlu0 %2254
  %v2256 = vsel %vm108, %v2255, 0
  %2258 = vmatpush.msra.mxu0 0.0
  %2259 = vmatpush.msra.mxu0 0.0
  %2260 = vmatpush.msra.mxu0 0.0
  %2261 = vmatpush.msra.mxu0 0.0
  %2262 = vmatpush.msra.mxu0 0.0
  %2263 = vmatpush.msra.mxu0 0.0
  %2264 = vmatpush.msra.mxu0 0.0
  %2265 = vmatpush.msra.mxu0 0.0
  %2266 = vmatpush.msra.mxu0 0.0
  %2267 = vmatpush.msra.mxu0 0.0
  %2268 = vmatpush.msra.mxu0 0.0
  %2269 = vmatpush.msra.mxu0 0.0
  %2270 = vmatpush.msra.mxu0 %v2245
  %2271 = vmatpush.msra.mxu0 %v2244
  %2272 = vmatpush.msra.mxu0 %v2243
  %2273 = vmatpush.msra.mxu0 %v2242
  %2274 = vmatmul.f32.gmra.mxu0 %v2256
  %v2275 = vpop.f32.mrf.mxu0
  %v2276 = vadd.f32 %v2248, %v2275
  %2277 = vdwg.mxu0
  %v2278 = vmax.f32 %v2276, 0.0
  %v2279 = vld [vmem:[%s7] sm:$0xff]
  %v2280 = vld [vmem:[%s7 + $0x8] sm:$0xff]
  %v2281 = vld [vmem:[%s7 + $0x10] sm:$0xff]
  %v2282 = vld [vmem:[%s7 + $0x18] sm:$0xff]
  %v2283 = vld [vmem:[%s7 + $0x20] sm:$0xff]
  %v2284 = vld [vmem:[%s7 + $0x28] sm:$0xff]
  %v2285 = vld [vmem:[%s7 + $0x30] sm:$0xff]
  %v2286 = vld [vmem:[%s7 + $0x38] sm:$0xff]
  %v2287 = vperm.slane %v55, 3
  %vm2288 = vcmask 523264
  %v2290 = vsel %vm2288, %v2278, 0
  %2292 = vmatpush.msra.mxu0 0.0
  %2293 = vmatpush.msra.mxu0 0.0
  %2294 = vmatpush.msra.mxu0 0.0
  %2295 = vmatpush.msra.mxu0 0.0
  %2296 = vmatpush.msra.mxu0 0.0
  %2297 = vmatpush.msra.mxu0 0.0
  %2298 = vmatpush.msra.mxu0 0.0
  %2299 = vmatpush.msra.mxu0 0.0
  %2300 = vmatpush.msra.mxu0 %v2286
  %2301 = vmatpush.msra.mxu0 %v2285
  %2302 = vmatpush.msra.mxu0 %v2284
  %2303 = vmatpush.msra.mxu0 %v2283
  %2304 = vmatpush.msra.mxu0 %v2282
  %2305 = vmatpush.msra.mxu0 %v2281
  %2306 = vmatpush.msra.mxu0 %v2280
  %2307 = vmatpush.msra.mxu0 %v2279
  %2308 = vmatmul.f32.gmra.mxu0 %v2290
  %v2309 = vpop.f32.mrf.mxu0
  %v2310 = vadd.f32 %v2287, %v2309
  %2311 = vdwg.mxu0
  %v2312 = vmax.f32 %v2310, 0.0
  %v2313 = vld [vmem:[%s8] sm:$0xff]
  %v2314 = vld [vmem:[%s8 + $0x8] sm:$0xff]
  %v2315 = vld [vmem:[%s8 + $0x10] sm:$0xff]
  %v2316 = vld [vmem:[%s8 + $0x18] sm:$0xff]
  %v2317 = vld [vmem:[#allocation2] sm:$0x1]
  %v2319 = vperm.slane %v2317, 0
  %v2322 = vsel %vm108, %v2312, 0
  %2324 = vmatpush.msra.mxu0 0.0
  %2325 = vmatpush.msra.mxu0 0.0
  %2326 = vmatpush.msra.mxu0 0.0
  %2327 = vmatpush.msra.mxu0 0.0
  %2328 = vmatpush.msra.mxu0 0.0
  %2329 = vmatpush.msra.mxu0 0.0
  %2330 = vmatpush.msra.mxu0 0.0
  %2331 = vmatpush.msra.mxu0 0.0
  %2332 = vmatpush.msra.mxu0 0.0
  %2333 = vmatpush.msra.mxu0 0.0
  %2334 = vmatpush.msra.mxu0 0.0
  %2335 = vmatpush.msra.mxu0 0.0
  %2336 = vmatpush.msra.mxu0 %v2316
  %2337 = vmatpush.msra.mxu0 %v2315
  %2338 = vmatpush.msra.mxu0 %v2314
  %2339 = vmatpush.msra.mxu0 %v2313
  %2340 = vmatmul.f32.gmra.mxu0 %v2322
  %v2341 = vpop.f32.mrf.mxu0
  %v2342 = vadd.f32 %v2319, %v2341
  %2343 = vdwg.mxu0
  %vm2344 = vcmask 1024
  %2345 = vst.msk [vmem:[%s12] sm:$0x3] %vm2344, %v2342
  // Predicated region
  $region50: #{model_forward.1} parent=0 // pred_check
    _
  $region51: #{model_forward.1} parent=0 // pred_check_branch
    %2347 = sbr.rel (0) target = $region53
  $region52: #{model_forward.1} parent=0 // pred_region
    _
  $region53: #{model_forward.1} parent=0 // pred_fallthru
    _
  // Predicated region
  $region54: #{model_forward.1} parent=0 // pred_check
    _
  $region55: #{model_forward.1} parent=0 // pred_check_branch
    %2349 = sbr.rel (0) target = $region57
  $region56: #{model_forward.1} parent=0 // pred_region
    _
  $region57: #{model_forward.1} parent=0 // pred_fallthru
    _

</llo_original>
